<compile_context>
chip_gen: v5e
topology: v5e:2x2
jax: 0.10.0
libtpu: 0.0.40
codegen_flags: <defaults>
</compile_context>

<pallas_src>
import math

import jax
import jax.numpy as jnp
from jax.experimental import pallas as pl
from jax.experimental.pallas import tpu as pltpu

_SUBLANE = 8    # f32 sublane tile
_LANE = 128     # lane tile


def _round_up(n: int, m: int) -> int:
    return ((n + m - 1) // m) * m


def _vae_kernel(x_ref, w_enc_ref, b_enc_ref, eps_ref, w_dec_ref, b_dec_ref,
                recon_ref, latent_ref):
    """Fused VAE forward: packed encode (1 matmul) -> reparameterize -> decode."""
    lp = eps_ref.shape[1]                       # padded latent size per head

    x = x_ref[...]                              # [Bp, Dp] bf16

    # --- encode: one MXU pass produces mu || logvar (lane-dense slab) ---
    enc = jnp.dot(x, w_enc_ref[...],
                  preferred_element_type=jnp.float32) + b_enc_ref[...]  # [Bp, 2*LP] f32
    mu = enc[:, :lp]                            # lane-aligned vreg selection
    logvar = enc[:, lp:]

    # --- reparameterize: z = mu + exp(0.5*logvar) * eps  (exp -> EUP slot) ---
    z = mu + jnp.exp(0.5 * logvar) * eps_ref[...]                       # [Bp, LP] f32

    # --- decode (f32 accumulate, f32 sigmoid, bf16 store) ---
    dec = jnp.dot(z.astype(w_dec_ref.dtype), w_dec_ref[...],
                  preferred_element_type=jnp.float32) + b_dec_ref[...]  # [Bp, Dp] f32
    recon_ref[...] = jax.nn.sigmoid(dec).astype(recon_ref.dtype)

    # Single lane-dense store of the packed latent slab (split in the wrapper).
    latent_ref[...] = enc


def _vmem_capacity_bytes() -> int:
    try:
        return int(pltpu.get_tpu_info().vmem_capacity_bytes)
    except Exception:
        return 64 << 20   # conservative (v7x per-TC VMEM)


def build_vae_forward(w_mu, b_mu, w_lv, b_lv, w_dec, b_dec, *, max_batch):
    """One-time packing of the VAE parameters; returns a jitted forward fn.

    All padding / bf16 casting / bias broadcasting happens HERE (init time),
    not per call, so the kernel is the only per-step HBM traffic of note.
    """
    D, L = int(w_mu.shape[0]), int(w_mu.shape[1])

    Bp = _round_up(max(int(max_batch), _SUBLANE), _SUBLANE)  # full sublanes
    Dp = _round_up(D, _LANE)                                 # full lanes
    LP = _round_up(max(L, _LANE), _LANE)                     # full lanes per head

    f32, bf16 = jnp.float32, jnp.bfloat16

    # Robust to (L,) / (1, L) / (D,) / (1, D) bias layouts from a state_dict.
    b_mu_f = jnp.reshape(jnp.asarray(b_mu, f32), (-1,))
    b_lv_f = jnp.reshape(jnp.asarray(b_lv, f32), (-1,))
    b_dec_f = jnp.reshape(jnp.asarray(b_dec, f32), (-1,))

    # Fused encoder weight: mu head in lanes [0, LP), logvar head in [LP, 2*LP).
    # Zero padding contributes exact zeros to the matmuls (math unchanged).
    w_enc_p = jnp.zeros((Dp, 2 * LP), bf16)
    w_enc_p = w_enc_p.at[:D, :L].set(jnp.asarray(w_mu, f32).astype(bf16))
    w_enc_p = w_enc_p.at[:D, LP:LP + L].set(jnp.asarray(w_lv, f32).astype(bf16))

    # Biases pre-broadcast to full [Bp, N] tiles (free at init; removes the
    # only non-tile-native operands and the in-kernel broadcast-add).
    b_enc_row = jnp.zeros((2 * LP,), f32).at[:L].set(b_mu_f).at[LP:LP + L].set(b_lv_f)
    b_enc_p = jnp.broadcast_to(b_enc_row, (Bp, 2 * LP))

    w_dec_p = jnp.zeros((LP, Dp), bf16).at[:L, :D].set(jnp.asarray(w_dec, f32).astype(bf16))
    b_dec_row = jnp.zeros((Dp,), f32).at[:D].set(b_dec_f)
    b_dec_p = jnp.broadcast_to(b_dec_row, (Bp, Dp))

    # Materialize the packed buffers once on device.
    w_enc_p, b_enc_p, w_dec_p, b_dec_p = jax.device_put(
        (w_enc_p, b_enc_p, w_dec_p, b_dec_p))

    out_shapes = [
        jax.ShapeDtypeStruct((Bp, Dp), bf16),      # recon (lane dense, bf16 store)
        jax.ShapeDtypeStruct((Bp, 2 * LP), f32),   # mu || logvar (lane dense)
    ]

    def _nbytes(shape, dtype):
        return math.prod(shape) * jnp.dtype(dtype).itemsize

    # No grid => no pipelining => exactly ONE VMEM buffer per operand.
    needed_bytes = (
        _nbytes((Bp, Dp), bf16)            # x
        + w_enc_p.nbytes + b_enc_p.nbytes
        + _nbytes((Bp, LP), f32)           # eps
        + w_dec_p.nbytes + b_dec_p.nbytes
        + sum(_nbytes(s.shape, s.dtype) for s in out_shapes)
    )
    vmem_cap = _vmem_capacity_bytes()
    headroom = 4 << 20
    if needed_bytes > vmem_cap - headroom:
        # TODO(synk): implement the tiled K-reduction / output-N grid path
        #             (Buffered weight DMA, f32 accumulator scratch, parallel
        #             axis for v7x's 2 TensorCores) for shapes that do not fit
        #             resident in VMEM.
        raise NotImplementedError(
            f"Resident-weight VAE kernel needs {needed_bytes} B of VMEM; "
            f"device has {vmem_cap} B. Tiled path not implemented.")
    vmem_limit = min(needed_bytes + headroom, vmem_cap)

    cost = pl.CostEstimate(
        flops=2 * Bp * Dp * (2 * LP) + 2 * Bp * LP * Dp,   # encoder + decoder matmuls
        transcendentals=Bp * LP + Bp * Dp,                 # exp + sigmoid
        bytes_accessed=needed_bytes,
    )

    vmem_spec = pl.BlockSpec(memory_space=pltpu.MemorySpace.VMEM)
    call = pl.pallas_call(
        _vae_kernel,
        in_specs=[vmem_spec] * 6,
        out_specs=[vmem_spec, vmem_spec],
        out_shape=out_shapes,
        compiler_params=pltpu.CompilerParams(vmem_limit_bytes=vmem_limit),
        cost_estimate=cost,
    )

    @jax.jit
    def forward(x_nchw, eps):
        B, C, H, W = x_nchw.shape
        assert C * H * W == D and B <= Bp and eps.shape == (B, L)
        # Per-call work is only the (tiny) activation pad + cast.
        x_p = jnp.zeros((Bp, Dp), bf16).at[:B, :D].set(
            x_nchw.reshape(B, D).astype(bf16))
        eps_p = jnp.zeros((Bp, LP), f32).at[:B, :L].set(eps.astype(f32))

        recon_p, latent_p = call(x_p, w_enc_p, b_enc_p, eps_p, w_dec_p, b_dec_p)

        recon = recon_p[:B, :D].reshape(B, C, H, W)     # bf16 (halved writeback)
        mu = latent_p[:B, :L]
        logvar = latent_p[:B, LP:LP + L]
        return recon, mu, logvar

    return forward


if __name__ == "__main__":
    # Small shapes consistent with a VAE on image-like NCHW input.
    B, C, H, W = 2, 4, 16, 16
    D = C * H * W          # 1024 flattened features
    L = 32                 # latent dim

    key = jax.random.PRNGKey(0)
    kx, kwm, kwl, kwd, ke = jax.random.split(key, 5)

    x = jax.random.normal(kx, (B, C, H, W), dtype=jnp.float32)

    # Deterministic synthetic parameters (encoder mu/logvar heads + decoder).
    w_mu = jax.random.normal(kwm, (D, L), dtype=jnp.float32) * 0.02
    b_mu = jnp.zeros((L,), dtype=jnp.float32)
    w_lv = jax.random.normal(kwl, (D, L), dtype=jnp.float32) * 0.02
    b_lv = jnp.zeros((L,), dtype=jnp.float32)
    w_dec = jax.random.normal(kwd, (L, D), dtype=jnp.float32) * 0.02
    b_dec = jnp.zeros((D,), dtype=jnp.float32)

    # Deterministic reparameterization noise (stands in for torch.randn_like).
    eps = jax.random.normal(ke, (B, L), dtype=jnp.float32)

    # One-time init (packing hoisted out of the per-call path), then forward.
    vae_forward = build_vae_forward(w_mu, b_mu, w_lv, b_lv, w_dec, b_dec,
                                    max_batch=B)
    recon, mu, logvar = vae_forward(x, eps)
    jax.block_until_ready((recon, mu, logvar))

    # Pure-JAX reference using the same bf16-weight / f32-accumulate math.
    xf = x.reshape(B, D).astype(jnp.bfloat16)
    mu_ref = jnp.dot(xf, w_mu.astype(jnp.bfloat16),
                     preferred_element_type=jnp.float32) + b_mu[None, :]
    lv_ref = jnp.dot(xf, w_lv.astype(jnp.bfloat16),
                     preferred_element_type=jnp.float32) + b_lv[None, :]
    z_ref = mu_ref + jnp.exp(0.5 * lv_ref) * eps
    dec_ref = jnp.dot(z_ref.astype(jnp.bfloat16), w_dec.astype(jnp.bfloat16),
                      preferred_element_type=jnp.float32) + b_dec[None, :]
    recon_ref = jax.nn.sigmoid(dec_ref).reshape(B, C, H, W)

    assert recon.shape == (B, C, H, W)
    assert mu.shape == (B, L) and logvar.shape == (B, L)
    assert jnp.allclose(mu, mu_ref, atol=2e-2, rtol=2e-2)
    assert jnp.allclose(logvar, lv_ref, atol=2e-2, rtol=2e-2)
    assert jnp.allclose(recon.astype(jnp.float32), recon_ref, atol=2e-2, rtol=2e-2)
    print("KERNEL_OK")
</pallas_src>

<mosaic_0001>
module attributes {stable_mosaic.version = 11 : i64} {
  func.func @_vae_kernel(%arg0: memref<8x1024xbf16, #tpu.memory_space<vmem>>, %arg1: memref<1024x256xbf16, #tpu.memory_space<vmem>>, %arg2: memref<8x256xf32, #tpu.memory_space<vmem>>, %arg3: memref<8x128xf32, #tpu.memory_space<vmem>>, %arg4: memref<128x1024xbf16, #tpu.memory_space<vmem>>, %arg5: memref<8x1024xf32, #tpu.memory_space<vmem>>, %arg6: memref<8x1024xbf16, #tpu.memory_space<vmem>>, %arg7: memref<8x256xf32, #tpu.memory_space<vmem>>) attributes {dimension_semantics = [], scalar_prefetch = 0 : i64, scratch_operands = 0 : i64, tpu.core_type = #tpu.core_type<tc>} {
    %c0 = arith.constant 0 : index
    %c0_0 = arith.constant 0 : index
    %0 = vector.load %arg0[%c0, %c0_0] : memref<8x1024xbf16, #tpu.memory_space<vmem>>, vector<8x1024xbf16>
    %c0_1 = arith.constant 0 : index
    %c0_2 = arith.constant 0 : index
    %1 = vector.load %arg1[%c0_1, %c0_2] : memref<1024x256xbf16, #tpu.memory_space<vmem>>, vector<1024x256xbf16>
    %cst = arith.constant dense<0.000000e+00> : vector<8x256xf32>
    %2 = tpu.matmul %0, %1, %cst {dimension_numbers = #tpu.dot_dimension_numbers<[1], [0], [0], [1], [0, 0, 1, 1], [], []>} : vector<8x1024xbf16>, vector<1024x256xbf16>, vector<8x256xf32> -> vector<8x256xf32>
    %c0_3 = arith.constant 0 : index
    %c0_4 = arith.constant 0 : index
    %3 = vector.load %arg2[%c0_3, %c0_4] : memref<8x256xf32, #tpu.memory_space<vmem>>, vector<8x256xf32>
    %4 = arith.addf %2, %3 : vector<8x256xf32>
    %5 = vector.extract_strided_slice %4 {offsets = [0, 0], sizes = [8, 128], strides = [1, 1]} : vector<8x256xf32> to vector<8x128xf32>
    %6 = vector.extract_strided_slice %4 {offsets = [0, 128], sizes = [8, 128], strides = [1, 1]} : vector<8x256xf32> to vector<8x128xf32>
    %cst_5 = arith.constant 5.000000e-01 : f32
    %7 = vector.broadcast %cst_5 : f32 to vector<8x128xf32>
    %8 = arith.mulf %7, %6 : vector<8x128xf32>
    %9 = math.exp %8 : vector<8x128xf32>
    %c0_6 = arith.constant 0 : index
    %c0_7 = arith.constant 0 : index
    %10 = vector.load %arg3[%c0_6, %c0_7] : memref<8x128xf32, #tpu.memory_space<vmem>>, vector<8x128xf32>
    %11 = arith.mulf %9, %10 : vector<8x128xf32>
    %12 = arith.addf %5, %11 : vector<8x128xf32>
    %13 = arith.truncf %12 : vector<8x128xf32> to vector<8x128xbf16>
    %c0_8 = arith.constant 0 : index
    %c0_9 = arith.constant 0 : index
    %14 = vector.load %arg4[%c0_8, %c0_9] : memref<128x1024xbf16, #tpu.memory_space<vmem>>, vector<128x1024xbf16>
    %cst_10 = arith.constant dense<0.000000e+00> : vector<8x1024xf32>
    %15 = tpu.matmul %13, %14, %cst_10 {dimension_numbers = #tpu.dot_dimension_numbers<[1], [0], [0], [1], [0, 0, 1, 1], [], []>} : vector<8x128xbf16>, vector<128x1024xbf16>, vector<8x1024xf32> -> vector<8x1024xf32>
    %c0_11 = arith.constant 0 : index
    %c0_12 = arith.constant 0 : index
    %16 = vector.load %arg5[%c0_11, %c0_12] : memref<8x1024xf32, #tpu.memory_space<vmem>>, vector<8x1024xf32>
    %17 = arith.addf %15, %16 : vector<8x1024xf32>
    %18 = arith.negf %17 : vector<8x1024xf32>
    %19 = math.exp %18 : vector<8x1024xf32>
    %cst_13 = arith.constant 1.000000e+00 : f32
    %20 = vector.broadcast %cst_13 : f32 to vector<8x1024xf32>
    %21 = arith.addf %20, %19 : vector<8x1024xf32>
    %22 = arith.divf %20, %21 : vector<8x1024xf32>
    %23 = arith.truncf %22 : vector<8x1024xf32> to vector<8x1024xbf16>
    %c0_14 = arith.constant 0 : index
    %c0_15 = arith.constant 0 : index
    %24 = vector.load %arg6[%c0_14, %c0_15] : memref<8x1024xbf16, #tpu.memory_space<vmem>>, vector<8x1024xbf16>
    tpu.vector_store %arg6[%c0_14, %c0_15], %23 {strides = array<i32>} : memref<8x1024xbf16, #tpu.memory_space<vmem>>, vector<8x1024xbf16>,
    %c0_16 = arith.constant 0 : index
    %c0_17 = arith.constant 0 : index
    %25 = vector.load %arg7[%c0_16, %c0_17] : memref<8x256xf32, #tpu.memory_space<vmem>>, vector<8x256xf32>
    tpu.vector_store %arg7[%c0_16, %c0_17], %4 {strides = array<i32>} : memref<8x256xf32, #tpu.memory_space<vmem>>, vector<8x256xf32>,
    return
  }
}

</mosaic_0001>

<llo_original>
// kernel: forward.1
$region0: #{forward.1}
  #allocation0 [shape = 'u32[]', space=smem, size = 0x4, offset = 0x4, fixed_abs, tag = 'smem constant byte address 0x4 - core index']
  #allocation1 [shape = 'u32[72,128]{1,0:T(1,128)}', space=vmem, size = 0x9000, scoped, tag = 'internal scratch']
  %s0 = inlined_call_operand.vmem [shape: bf16[8,1024], index: 0, kind: input, shape index: {}]
  %s1 = inlined_call_operand.hbm [shape: bf16[1024,256], index: 1, kind: input, shape index: {}]
  %s2 = inlined_call_operand.vmem [shape: f32[8,256], index: 2, kind: input, shape index: {}]
  %s3 = inlined_call_operand.vmem [shape: f32[8,128], index: 3, kind: input, shape index: {}]
  %s4 = inlined_call_operand.hbm [shape: bf16[128,1024], index: 4, kind: input, shape index: {}]
  %s5 = inlined_call_operand.vmem [shape: f32[8,1024], index: 5, kind: input, shape index: {}]
  %s6 = inlined_call_operand.vmem [shape: bf16[8,1024], index: 6, kind: output, shape index: {0}]
  %s7 = inlined_call_operand.vmem [shape: f32[8,256], index: 7, kind: output, shape index: {1}]
  %8 = xla_tuple %s6, %s7
  %s9 = sld [smem:[#allocation0]]
  $region50: #{forward.1} parent=0
    _
  %s11 = ssub.s32 1, %s9
  %s12 = scalar_select 0, %s11, %s9
  $region1: #{forward.1} parent=0
    #allocation2 [shape = 'u8[524288]{0}', space=vmem, size = 0x80000, scoped, tag = 'input window, operand 1, single buffered']
    #allocation3 [shape = 's32[1]{0}', space=sflag, size = 0x4, scoped, tag = 'scoped memory for forward.1']
    #allocation4 [shape = 'u8[262144]{0}', space=vmem, size = 0x40000, scoped, tag = 'input window, operand 4, single buffered']
    #allocation5 [shape = 's32[1]{0}', space=sflag, size = 0x4, scoped, tag = 'scoped memory for forward.1']
    %13 = vsyncpa [#allocation3], 0
    %14 = vsyncpa [#allocation5], 0
    // Predicated region
    $region2: #{forward.1} parent=1 // pred_check
      _
    $region3: #{forward.1} parent=1 // pred_check_branch
      %16 = sbr.rel (0) target = $region5
    $region4: #{forward.1} parent=1 // pred_region
      _
    $region5: #{forward.1} parent=1 // pred_fallthru
      _
    // Predicated region
    $region6: #{forward.1} parent=1 // pred_check
      _
    $region7: #{forward.1} parent=1 // pred_check_branch
      %18 = sbr.rel (0) target = $region9
    $region8: #{forward.1} parent=1 // pred_region
      %20 = vsyncadd [#allocation3], 0
      %s21 = sshll.u32 %s1, 4
      %s22 = int_to_ptr.hbm [resolvable:$true] %s21
      %s23 = sshll.u32 [#allocation2], 4
      %s24 = int_to_ptr.vmem [resolvable:$true] %s23
      %29 = dma.hbm_to_vmem [thread:$0]  %s22, 16384, %s24, [#allocation3], 128, 128, 8
    $region9: #{forward.1} parent=1 // pred_fallthru
      _
    // Predicated region
    $region10: #{forward.1} parent=1 // pred_check
      _
    $region11: #{forward.1} parent=1 // pred_check_branch
      %31 = sbr.rel (0) target = $region13
    $region12: #{forward.1} parent=1 // pred_region
      _
    $region13: #{forward.1} parent=1 // pred_fallthru
      _
    // Predicated region
    $region14: #{forward.1} parent=1 // pred_check
      _
    $region15: #{forward.1} parent=1 // pred_check_branch
      %33 = sbr.rel (0) target = $region17
    $region16: #{forward.1} parent=1 // pred_region
      _
    $region17: #{forward.1} parent=1 // pred_fallthru
      _
    // Predicated region
    $region18: #{forward.1} parent=1 // pred_check
      _
    $region19: #{forward.1} parent=1 // pred_check_branch
      %35 = sbr.rel (0) target = $region21
    $region20: #{forward.1} parent=1 // pred_region
      %37 = vsyncadd [#allocation5], 0
      %s38 = sshll.u32 %s4, 4
      %s39 = int_to_ptr.hbm [resolvable:$true] %s38
      %s40 = sshll.u32 [#allocation4], 4
      %s41 = int_to_ptr.vmem [resolvable:$true] %s40
      %46 = dma.hbm_to_vmem [thread:$0]  %s39, 8192, %s41, [#allocation5], 512, 512, 32
    $region21: #{forward.1} parent=1 // pred_fallthru
      _
    // Predicated region
    $region22: #{forward.1} parent=1 // pred_check
      _
    $region23: #{forward.1} parent=1 // pred_check_branch
      %48 = sbr.rel (0) target = $region25
    $region24: #{forward.1} parent=1 // pred_region
      _
    $region25: #{forward.1} parent=1 // pred_fallthru
      _
    // Predicated region
    $region26: #{forward.1} parent=1 // pred_check
      _
    $region27: #{forward.1} parent=1 // pred_check_branch
      %50 = sbr.rel (0) target = $region29
    $region28: #{forward.1} parent=1 // pred_region
      %52 = dma.done [#allocation3], 16384
    $region29: #{forward.1} parent=1 // pred_fallthru
      _
    // Predicated region
    $region30: #{forward.1} parent=1 // pred_check
      _
    $region31: #{forward.1} parent=1 // pred_check_branch
      %54 = sbr.rel (0) target = $region33
    $region32: #{forward.1} parent=1 // pred_region
      %56 = dma.done [#allocation5], 8192
    $region33: #{forward.1} parent=1 // pred_fallthru
      _
    %v57 = vld [vmem:[%s0] sm:$0xff]
    %v58 = vld [vmem:[%s0 + $0x8] sm:$0xff]
    %v59 = vld [vmem:[%s0 + $0x10] sm:$0xff]
    %v60 = vld [vmem:[%s0 + $0x18] sm:$0xff]
    %v61 = vld [vmem:[#allocation2] sm:$0xff]
    %v62 = vld [vmem:[#allocation2 + $0x8] sm:$0xff]
    %v63 = vld [vmem:[#allocation2 + $0x10] sm:$0xff]
    %v64 = vld [vmem:[#allocation2 + $0x18] sm:$0xff]
    %v65 = vld [vmem:[#allocation2 + $0x20] sm:$0xff]
    %v66 = vld [vmem:[#allocation2 + $0x28] sm:$0xff]
    %v67 = vld [vmem:[#allocation2 + $0x30] sm:$0xff]
    %v68 = vld [vmem:[#allocation2 + $0x38] sm:$0xff]
    %v69 = vld [vmem:[#allocation2 + $0x40] sm:$0xff]
    %v70 = vld [vmem:[#allocation2 + $0x48] sm:$0xff]
    %v71 = vld [vmem:[#allocation2 + $0x50] sm:$0xff]
    %v72 = vld [vmem:[#allocation2 + $0x58] sm:$0xff]
    %v73 = vld [vmem:[#allocation2 + $0x60] sm:$0xff]
    %v74 = vld [vmem:[#allocation2 + $0x68] sm:$0xff]
    %v75 = vld [vmem:[#allocation2 + $0x70] sm:$0xff]
    %v76 = vld [vmem:[#allocation2 + $0x78] sm:$0xff]
    %v77 = vld [vmem:[#allocation2 + $0x80] sm:$0xff]
    %v78 = vld [vmem:[#allocation2 + $0x88] sm:$0xff]
    %v79 = vld [vmem:[#allocation2 + $0x90] sm:$0xff]
    %v80 = vld [vmem:[#allocation2 + $0x98] sm:$0xff]
    %v81 = vld [vmem:[#allocation2 + $0xa0] sm:$0xff]
    %v82 = vld [vmem:[#allocation2 + $0xa8] sm:$0xff]
    %v83 = vld [vmem:[#allocation2 + $0xb0] sm:$0xff]
    %v84 = vld [vmem:[#allocation2 + $0xb8] sm:$0xff]
    %v85 = vld [vmem:[#allocation2 + $0xc0] sm:$0xff]
    %v86 = vld [vmem:[#allocation2 + $0xc8] sm:$0xff]
    %v87 = vld [vmem:[#allocation2 + $0xd0] sm:$0xff]
    %v88 = vld [vmem:[#allocation2 + $0xd8] sm:$0xff]
    %v89 = vld [vmem:[#allocation2 + $0xe0] sm:$0xff]
    %v90 = vld [vmem:[#allocation2 + $0xe8] sm:$0xff]
    %v91 = vld [vmem:[#allocation2 + $0xf0] sm:$0xff]
    %v92 = vld [vmem:[#allocation2 + $0xf8] sm:$0xff]
    %v93 = vld [vmem:[#allocation2 + $0x100] sm:$0xff]
    %v94 = vld [vmem:[#allocation2 + $0x108] sm:$0xff]
    %v95 = vld [vmem:[#allocation2 + $0x110] sm:$0xff]
    %v96 = vld [vmem:[#allocation2 + $0x118] sm:$0xff]
    %v97 = vld [vmem:[#allocation2 + $0x120] sm:$0xff]
    %v98 = vld [vmem:[#allocation2 + $0x128] sm:$0xff]
    %v99 = vld [vmem:[#allocation2 + $0x130] sm:$0xff]
    %v100 = vld [vmem:[#allocation2 + $0x138] sm:$0xff]
    %v101 = vld [vmem:[#allocation2 + $0x140] sm:$0xff]
    %v102 = vld [vmem:[#allocation2 + $0x148] sm:$0xff]
    %v103 = vld [vmem:[#allocation2 + $0x150] sm:$0xff]
    %v104 = vld [vmem:[#allocation2 + $0x158] sm:$0xff]
    %v105 = vld [vmem:[#allocation2 + $0x160] sm:$0xff]
    %v106 = vld [vmem:[#allocation2 + $0x168] sm:$0xff]
    %v107 = vld [vmem:[#allocation2 + $0x170] sm:$0xff]
    %v108 = vld [vmem:[#allocation2 + $0x178] sm:$0xff]
    %v109 = vld [vmem:[#allocation2 + $0x180] sm:$0xff]
    %v110 = vld [vmem:[#allocation2 + $0x188] sm:$0xff]
    %v111 = vld [vmem:[#allocation2 + $0x190] sm:$0xff]
    %v112 = vld [vmem:[#allocation2 + $0x198] sm:$0xff]
    %v113 = vld [vmem:[#allocation2 + $0x1a0] sm:$0xff]
    %v114 = vld [vmem:[#allocation2 + $0x1a8] sm:$0xff]
    %v115 = vld [vmem:[#allocation2 + $0x1b0] sm:$0xff]
    %v116 = vld [vmem:[#allocation2 + $0x1b8] sm:$0xff]
    %v117 = vld [vmem:[#allocation2 + $0x1c0] sm:$0xff]
    %v118 = vld [vmem:[#allocation2 + $0x1c8] sm:$0xff]
    %v119 = vld [vmem:[#allocation2 + $0x1d0] sm:$0xff]
    %v120 = vld [vmem:[#allocation2 + $0x1d8] sm:$0xff]
    %v121 = vld [vmem:[#allocation2 + $0x1e0] sm:$0xff]
    %v122 = vld [vmem:[#allocation2 + $0x1e8] sm:$0xff]
    %v123 = vld [vmem:[#allocation2 + $0x1f0] sm:$0xff]
    %v124 = vld [vmem:[#allocation2 + $0x1f8] sm:$0xff]
    %v125 = vld [vmem:[#allocation2 + $0x200] sm:$0xff]
    %v126 = vld [vmem:[#allocation2 + $0x208] sm:$0xff]
    %v127 = vld [vmem:[#allocation2 + $0x210] sm:$0xff]
    %v128 = vld [vmem:[#allocation2 + $0x218] sm:$0xff]
    %v129 = vld [vmem:[#allocation2 + $0x220] sm:$0xff]
    %v130 = vld [vmem:[#allocation2 + $0x228] sm:$0xff]
    %v131 = vld [vmem:[#allocation2 + $0x230] sm:$0xff]
    %v132 = vld [vmem:[#allocation2 + $0x238] sm:$0xff]
    %v133 = vld [vmem:[#allocation2 + $0x240] sm:$0xff]
    %v134 = vld [vmem:[#allocation2 + $0x248] sm:$0xff]
    %v135 = vld [vmem:[#allocation2 + $0x250] sm:$0xff]
    %v136 = vld [vmem:[#allocation2 + $0x258] sm:$0xff]
    %v137 = vld [vmem:[#allocation2 + $0x260] sm:$0xff]
    %v138 = vld [vmem:[#allocation2 + $0x268] sm:$0xff]
    %v139 = vld [vmem:[#allocation2 + $0x270] sm:$0xff]
    %v140 = vld [vmem:[#allocation2 + $0x278] sm:$0xff]
    %v141 = vld [vmem:[#allocation2 + $0x280] sm:$0xff]
    %v142 = vld [vmem:[#allocation2 + $0x288] sm:$0xff]
    %v143 = vld [vmem:[#allocation2 + $0x290] sm:$0xff]
    %v144 = vld [vmem:[#allocation2 + $0x298] sm:$0xff]
    %v145 = vld [vmem:[#allocation2 + $0x2a0] sm:$0xff]
    %v146 = vld [vmem:[#allocation2 + $0x2a8] sm:$0xff]
    %v147 = vld [vmem:[#allocation2 + $0x2b0] sm:$0xff]
    %v148 = vld [vmem:[#allocation2 + $0x2b8] sm:$0xff]
    %v149 = vld [vmem:[#allocation2 + $0x2c0] sm:$0xff]
    %v150 = vld [vmem:[#allocation2 + $0x2c8] sm:$0xff]
    %v151 = vld [vmem:[#allocation2 + $0x2d0] sm:$0xff]
    %v152 = vld [vmem:[#allocation2 + $0x2d8] sm:$0xff]
    %v153 = vld [vmem:[#allocation2 + $0x2e0] sm:$0xff]
    %v154 = vld [vmem:[#allocation2 + $0x2e8] sm:$0xff]
    %v155 = vld [vmem:[#allocation2 + $0x2f0] sm:$0xff]
    %v156 = vld [vmem:[#allocation2 + $0x2f8] sm:$0xff]
    %v157 = vld [vmem:[#allocation2 + $0x300] sm:$0xff]
    %v158 = vld [vmem:[#allocation2 + $0x308] sm:$0xff]
    %v159 = vld [vmem:[#allocation2 + $0x310] sm:$0xff]
    %v160 = vld [vmem:[#allocation2 + $0x318] sm:$0xff]
    %v161 = vld [vmem:[#allocation2 + $0x320] sm:$0xff]
    %v162 = vld [vmem:[#allocation2 + $0x328] sm:$0xff]
    %v163 = vld [vmem:[#allocation2 + $0x330] sm:$0xff]
    %v164 = vld [vmem:[#allocation2 + $0x338] sm:$0xff]
    %v165 = vld [vmem:[#allocation2 + $0x340] sm:$0xff]
    %v166 = vld [vmem:[#allocation2 + $0x348] sm:$0xff]
    %v167 = vld [vmem:[#allocation2 + $0x350] sm:$0xff]
    %v168 = vld [vmem:[#allocation2 + $0x358] sm:$0xff]
    %v169 = vld [vmem:[#allocation2 + $0x360] sm:$0xff]
    %v170 = vld [vmem:[#allocation2 + $0x368] sm:$0xff]
    %v171 = vld [vmem:[#allocation2 + $0x370] sm:$0xff]
    %v172 = vld [vmem:[#allocation2 + $0x378] sm:$0xff]
    %v173 = vld [vmem:[#allocation2 + $0x380] sm:$0xff]
    %v174 = vld [vmem:[#allocation2 + $0x388] sm:$0xff]
    %v175 = vld [vmem:[#allocation2 + $0x390] sm:$0xff]
    %v176 = vld [vmem:[#allocation2 + $0x398] sm:$0xff]
    %v177 = vld [vmem:[#allocation2 + $0x3a0] sm:$0xff]
    %v178 = vld [vmem:[#allocation2 + $0x3a8] sm:$0xff]
    %v179 = vld [vmem:[#allocation2 + $0x3b0] sm:$0xff]
    %v180 = vld [vmem:[#allocation2 + $0x3b8] sm:$0xff]
    %v181 = vld [vmem:[#allocation2 + $0x3c0] sm:$0xff]
    %v182 = vld [vmem:[#allocation2 + $0x3c8] sm:$0xff]
    %v183 = vld [vmem:[#allocation2 + $0x3d0] sm:$0xff]
    %v184 = vld [vmem:[#allocation2 + $0x3d8] sm:$0xff]
    %v185 = vld [vmem:[#allocation2 + $0x3e0] sm:$0xff]
    %v186 = vld [vmem:[#allocation2 + $0x3e8] sm:$0xff]
    %v187 = vld [vmem:[#allocation2 + $0x3f0] sm:$0xff]
    %v188 = vld [vmem:[#allocation2 + $0x3f8] sm:$0xff]
    %v189 = vld [vmem:[%s2] sm:$0xff]
    %v190 = vld [vmem:[%s2 + $0x8] sm:$0xff]
    %v195 = vunpack.c.l.b16 %v57
    %v196 = vunpack.c.h.b16 %v57
    %v197 = vunpack.c.l.b16 %v58
    %v198 = vunpack.c.h.b16 %v58
    %v199 = vunpack.c.l.b16 %v59
    %v200 = vunpack.c.h.b16 %v59
    %v201 = vunpack.c.l.b16 %v60
    %v202 = vunpack.c.h.b16 %v60
    %v203 = vpack.c.b16 %v195, %v195
    %v204 = vpack.c.b16 %v196, %v196
    %v205 = vpack.c.b16 %v197, %v197
    %v206 = vpack.c.b16 %v198, %v198
    %v207 = vpack.c.b16 %v199, %v199
    %v208 = vpack.c.b16 %v200, %v200
    %v209 = vpack.c.b16 %v201, %v201
    %v210 = vpack.c.b16 %v202, %v202
    %v347 = vunpack.c.l.b16 %v61
    %v348 = vunpack.c.h.b16 %v61
    %v349 = vunpack.c.l.b16 %v62
    %v350 = vunpack.c.h.b16 %v62
    %v351 = vunpack.c.l.b16 %v63
    %v352 = vunpack.c.h.b16 %v63
    %v353 = vunpack.c.l.b16 %v64
    %v354 = vunpack.c.h.b16 %v64
    %v355 = vunpack.c.l.b16 %v65
    %v356 = vunpack.c.h.b16 %v65
    %v357 = vunpack.c.l.b16 %v66
    %v358 = vunpack.c.h.b16 %v66
    %v359 = vunpack.c.l.b16 %v67
    %v360 = vunpack.c.h.b16 %v67
    %v361 = vunpack.c.l.b16 %v68
    %v362 = vunpack.c.h.b16 %v68
    %v363 = vunpack.c.l.b16 %v69
    %v364 = vunpack.c.h.b16 %v69
    %v365 = vunpack.c.l.b16 %v70
    %v366 = vunpack.c.h.b16 %v70
    %v367 = vunpack.c.l.b16 %v71
    %v368 = vunpack.c.h.b16 %v71
    %v369 = vunpack.c.l.b16 %v72
    %v370 = vunpack.c.h.b16 %v72
    %v371 = vunpack.c.l.b16 %v73
    %v372 = vunpack.c.h.b16 %v73
    %v373 = vunpack.c.l.b16 %v74
    %v374 = vunpack.c.h.b16 %v74
    %v375 = vunpack.c.l.b16 %v75
    %v376 = vunpack.c.h.b16 %v75
    %v377 = vunpack.c.l.b16 %v76
    %v378 = vunpack.c.h.b16 %v76
    %v379 = vunpack.c.l.b16 %v77
    %v380 = vunpack.c.h.b16 %v77
    %v381 = vunpack.c.l.b16 %v78
    %v382 = vunpack.c.h.b16 %v78
    %v383 = vunpack.c.l.b16 %v79
    %v384 = vunpack.c.h.b16 %v79
    %v385 = vunpack.c.l.b16 %v80
    %v386 = vunpack.c.h.b16 %v80
    %v387 = vunpack.c.l.b16 %v81
    %v388 = vunpack.c.h.b16 %v81
    %v389 = vunpack.c.l.b16 %v82
    %v390 = vunpack.c.h.b16 %v82
    %v391 = vunpack.c.l.b16 %v83
    %v392 = vunpack.c.h.b16 %v83
    %v393 = vunpack.c.l.b16 %v84
    %v394 = vunpack.c.h.b16 %v84
    %v395 = vunpack.c.l.b16 %v85
    %v396 = vunpack.c.h.b16 %v85
    %v397 = vunpack.c.l.b16 %v86
    %v398 = vunpack.c.h.b16 %v86
    %v399 = vunpack.c.l.b16 %v87
    %v400 = vunpack.c.h.b16 %v87
    %v401 = vunpack.c.l.b16 %v88
    %v402 = vunpack.c.h.b16 %v88
    %v403 = vunpack.c.l.b16 %v89
    %v404 = vunpack.c.h.b16 %v89
    %v405 = vunpack.c.l.b16 %v90
    %v406 = vunpack.c.h.b16 %v90
    %v407 = vunpack.c.l.b16 %v91
    %v408 = vunpack.c.h.b16 %v91
    %v409 = vunpack.c.l.b16 %v92
    %v410 = vunpack.c.h.b16 %v92
    %v411 = vunpack.c.l.b16 %v93
    %v412 = vunpack.c.h.b16 %v93
    %v413 = vunpack.c.l.b16 %v94
    %v414 = vunpack.c.h.b16 %v94
    %v415 = vunpack.c.l.b16 %v95
    %v416 = vunpack.c.h.b16 %v95
    %v417 = vunpack.c.l.b16 %v96
    %v418 = vunpack.c.h.b16 %v96
    %v419 = vunpack.c.l.b16 %v97
    %v420 = vunpack.c.h.b16 %v97
    %v421 = vunpack.c.l.b16 %v98
    %v422 = vunpack.c.h.b16 %v98
    %v423 = vunpack.c.l.b16 %v99
    %v424 = vunpack.c.h.b16 %v99
    %v425 = vunpack.c.l.b16 %v100
    %v426 = vunpack.c.h.b16 %v100
    %v427 = vunpack.c.l.b16 %v101
    %v428 = vunpack.c.h.b16 %v101
    %v429 = vunpack.c.l.b16 %v102
    %v430 = vunpack.c.h.b16 %v102
    %v431 = vunpack.c.l.b16 %v103
    %v432 = vunpack.c.h.b16 %v103
    %v433 = vunpack.c.l.b16 %v104
    %v434 = vunpack.c.h.b16 %v104
    %v435 = vunpack.c.l.b16 %v105
    %v436 = vunpack.c.h.b16 %v105
    %v437 = vunpack.c.l.b16 %v106
    %v438 = vunpack.c.h.b16 %v106
    %v439 = vunpack.c.l.b16 %v107
    %v440 = vunpack.c.h.b16 %v107
    %v441 = vunpack.c.l.b16 %v108
    %v442 = vunpack.c.h.b16 %v108
    %v443 = vunpack.c.l.b16 %v109
    %v444 = vunpack.c.h.b16 %v109
    %v445 = vunpack.c.l.b16 %v110
    %v446 = vunpack.c.h.b16 %v110
    %v447 = vunpack.c.l.b16 %v111
    %v448 = vunpack.c.h.b16 %v111
    %v449 = vunpack.c.l.b16 %v112
    %v450 = vunpack.c.h.b16 %v112
    %v451 = vunpack.c.l.b16 %v113
    %v452 = vunpack.c.h.b16 %v113
    %v453 = vunpack.c.l.b16 %v114
    %v454 = vunpack.c.h.b16 %v114
    %v455 = vunpack.c.l.b16 %v115
    %v456 = vunpack.c.h.b16 %v115
    %v457 = vunpack.c.l.b16 %v116
    %v458 = vunpack.c.h.b16 %v116
    %v459 = vunpack.c.l.b16 %v117
    %v460 = vunpack.c.h.b16 %v117
    %v461 = vunpack.c.l.b16 %v118
    %v462 = vunpack.c.h.b16 %v118
    %v463 = vunpack.c.l.b16 %v119
    %v464 = vunpack.c.h.b16 %v119
    %v465 = vunpack.c.l.b16 %v120
    %v466 = vunpack.c.h.b16 %v120
    %v467 = vunpack.c.l.b16 %v121
    %v468 = vunpack.c.h.b16 %v121
    %v469 = vunpack.c.l.b16 %v122
    %v470 = vunpack.c.h.b16 %v122
    %v471 = vunpack.c.l.b16 %v123
    %v472 = vunpack.c.h.b16 %v123
    %v473 = vunpack.c.l.b16 %v124
    %v474 = vunpack.c.h.b16 %v124
    %v475 = vunpack.c.l.b16 %v125
    %v476 = vunpack.c.h.b16 %v125
    %v477 = vunpack.c.l.b16 %v126
    %v478 = vunpack.c.h.b16 %v126
    %v479 = vunpack.c.l.b16 %v127
    %v480 = vunpack.c.h.b16 %v127
    %v481 = vunpack.c.l.b16 %v128
    %v482 = vunpack.c.h.b16 %v128
    %v483 = vunpack.c.l.b16 %v129
    %v484 = vunpack.c.h.b16 %v129
    %v485 = vunpack.c.l.b16 %v130
    %v486 = vunpack.c.h.b16 %v130
    %v487 = vunpack.c.l.b16 %v131
    %v488 = vunpack.c.h.b16 %v131
    %v489 = vunpack.c.l.b16 %v132
    %v490 = vunpack.c.h.b16 %v132
    %v491 = vunpack.c.l.b16 %v133
    %v492 = vunpack.c.h.b16 %v133
    %v493 = vunpack.c.l.b16 %v134
    %v494 = vunpack.c.h.b16 %v134
    %v495 = vunpack.c.l.b16 %v135
    %v496 = vunpack.c.h.b16 %v135
    %v497 = vunpack.c.l.b16 %v136
    %v498 = vunpack.c.h.b16 %v136
    %v499 = vunpack.c.l.b16 %v137
    %v500 = vunpack.c.h.b16 %v137
    %v501 = vunpack.c.l.b16 %v138
    %v502 = vunpack.c.h.b16 %v138
    %v503 = vunpack.c.l.b16 %v139
    %v504 = vunpack.c.h.b16 %v139
    %v505 = vunpack.c.l.b16 %v140
    %v506 = vunpack.c.h.b16 %v140
    %v507 = vunpack.c.l.b16 %v141
    %v508 = vunpack.c.h.b16 %v141
    %v509 = vunpack.c.l.b16 %v142
    %v510 = vunpack.c.h.b16 %v142
    %v511 = vunpack.c.l.b16 %v143
    %v512 = vunpack.c.h.b16 %v143
    %v513 = vunpack.c.l.b16 %v144
    %v514 = vunpack.c.h.b16 %v144
    %v515 = vunpack.c.l.b16 %v145
    %v516 = vunpack.c.h.b16 %v145
    %v517 = vunpack.c.l.b16 %v146
    %v518 = vunpack.c.h.b16 %v146
    %v519 = vunpack.c.l.b16 %v147
    %v520 = vunpack.c.h.b16 %v147
    %v521 = vunpack.c.l.b16 %v148
    %v522 = vunpack.c.h.b16 %v148
    %v523 = vunpack.c.l.b16 %v149
    %v524 = vunpack.c.h.b16 %v149
    %v525 = vunpack.c.l.b16 %v150
    %v526 = vunpack.c.h.b16 %v150
    %v527 = vunpack.c.l.b16 %v151
    %v528 = vunpack.c.h.b16 %v151
    %v529 = vunpack.c.l.b16 %v152
    %v530 = vunpack.c.h.b16 %v152
    %v531 = vunpack.c.l.b16 %v153
    %v532 = vunpack.c.h.b16 %v153
    %v533 = vunpack.c.l.b16 %v154
    %v534 = vunpack.c.h.b16 %v154
    %v535 = vunpack.c.l.b16 %v155
    %v536 = vunpack.c.h.b16 %v155
    %v537 = vunpack.c.l.b16 %v156
    %v538 = vunpack.c.h.b16 %v156
    %v539 = vunpack.c.l.b16 %v157
    %v540 = vunpack.c.h.b16 %v157
    %v541 = vunpack.c.l.b16 %v158
    %v542 = vunpack.c.h.b16 %v158
    %v543 = vunpack.c.l.b16 %v159
    %v544 = vunpack.c.h.b16 %v159
    %v545 = vunpack.c.l.b16 %v160
    %v546 = vunpack.c.h.b16 %v160
    %v547 = vunpack.c.l.b16 %v161
    %v548 = vunpack.c.h.b16 %v161
    %v549 = vunpack.c.l.b16 %v162
    %v550 = vunpack.c.h.b16 %v162
    %v551 = vunpack.c.l.b16 %v163
    %v552 = vunpack.c.h.b16 %v163
    %v553 = vunpack.c.l.b16 %v164
    %v554 = vunpack.c.h.b16 %v164
    %v555 = vunpack.c.l.b16 %v165
    %v556 = vunpack.c.h.b16 %v165
    %v557 = vunpack.c.l.b16 %v166
    %v558 = vunpack.c.h.b16 %v166
    %v559 = vunpack.c.l.b16 %v167
    %v560 = vunpack.c.h.b16 %v167
    %v561 = vunpack.c.l.b16 %v168
    %v562 = vunpack.c.h.b16 %v168
    %v563 = vunpack.c.l.b16 %v169
    %v564 = vunpack.c.h.b16 %v169
    %v565 = vunpack.c.l.b16 %v170
    %v566 = vunpack.c.h.b16 %v170
    %v567 = vunpack.c.l.b16 %v171
    %v568 = vunpack.c.h.b16 %v171
    %v569 = vunpack.c.l.b16 %v172
    %v570 = vunpack.c.h.b16 %v172
    %v571 = vunpack.c.l.b16 %v173
    %v572 = vunpack.c.h.b16 %v173
    %v573 = vunpack.c.l.b16 %v174
    %v574 = vunpack.c.h.b16 %v174
    %v575 = vunpack.c.l.b16 %v175
    %v576 = vunpack.c.h.b16 %v175
    %v577 = vunpack.c.l.b16 %v176
    %v578 = vunpack.c.h.b16 %v176
    %v579 = vunpack.c.l.b16 %v177
    %v580 = vunpack.c.h.b16 %v177
    %v581 = vunpack.c.l.b16 %v178
    %v582 = vunpack.c.h.b16 %v178
    %v583 = vunpack.c.l.b16 %v179
    %v584 = vunpack.c.h.b16 %v179
    %v585 = vunpack.c.l.b16 %v180
    %v586 = vunpack.c.h.b16 %v180
    %v587 = vunpack.c.l.b16 %v181
    %v588 = vunpack.c.h.b16 %v181
    %v589 = vunpack.c.l.b16 %v182
    %v590 = vunpack.c.h.b16 %v182
    %v591 = vunpack.c.l.b16 %v183
    %v592 = vunpack.c.h.b16 %v183
    %v593 = vunpack.c.l.b16 %v184
    %v594 = vunpack.c.h.b16 %v184
    %v595 = vunpack.c.l.b16 %v185
    %v596 = vunpack.c.h.b16 %v185
    %v597 = vunpack.c.l.b16 %v186
    %v598 = vunpack.c.h.b16 %v186
    %v599 = vunpack.c.l.b16 %v187
    %v600 = vunpack.c.h.b16 %v187
    %v601 = vunpack.c.l.b16 %v188
    %v602 = vunpack.c.h.b16 %v188
    %v603 = vpack.c.b16 %v349, %v347
    %v604 = vpack.c.b16 %v350, %v348
    %v605 = vpack.c.b16 %v353, %v351
    %v606 = vpack.c.b16 %v354, %v352
    %v607 = vpack.c.b16 %v357, %v355
    %v608 = vpack.c.b16 %v358, %v356
    %v609 = vpack.c.b16 %v361, %v359
    %v610 = vpack.c.b16 %v362, %v360
    %v611 = vpack.c.b16 %v365, %v363
    %v612 = vpack.c.b16 %v366, %v364
    %v613 = vpack.c.b16 %v369, %v367
    %v614 = vpack.c.b16 %v370, %v368
    %v615 = vpack.c.b16 %v373, %v371
    %v616 = vpack.c.b16 %v374, %v372
    %v617 = vpack.c.b16 %v377, %v375
    %v618 = vpack.c.b16 %v378, %v376
    %v619 = vpack.c.b16 %v381, %v379
    %v620 = vpack.c.b16 %v382, %v380
    %v621 = vpack.c.b16 %v385, %v383
    %v622 = vpack.c.b16 %v386, %v384
    %v623 = vpack.c.b16 %v389, %v387
    %v624 = vpack.c.b16 %v390, %v388
    %v625 = vpack.c.b16 %v393, %v391
    %v626 = vpack.c.b16 %v394, %v392
    %v627 = vpack.c.b16 %v397, %v395
    %v628 = vpack.c.b16 %v398, %v396
    %v629 = vpack.c.b16 %v401, %v399
    %v630 = vpack.c.b16 %v402, %v400
    %v631 = vpack.c.b16 %v405, %v403
    %v632 = vpack.c.b16 %v406, %v404
    %v633 = vpack.c.b16 %v409, %v407
    %v634 = vpack.c.b16 %v410, %v408
    %v635 = vpack.c.b16 %v413, %v411
    %v636 = vpack.c.b16 %v414, %v412
    %v637 = vpack.c.b16 %v417, %v415
    %v638 = vpack.c.b16 %v418, %v416
    %v639 = vpack.c.b16 %v421, %v419
    %v640 = vpack.c.b16 %v422, %v420
    %v641 = vpack.c.b16 %v425, %v423
    %v642 = vpack.c.b16 %v426, %v424
    %v643 = vpack.c.b16 %v429, %v427
    %v644 = vpack.c.b16 %v430, %v428
    %v645 = vpack.c.b16 %v433, %v431
    %v646 = vpack.c.b16 %v434, %v432
    %v647 = vpack.c.b16 %v437, %v435
    %v648 = vpack.c.b16 %v438, %v436
    %v649 = vpack.c.b16 %v441, %v439
    %v650 = vpack.c.b16 %v442, %v440
    %v651 = vpack.c.b16 %v445, %v443
    %v652 = vpack.c.b16 %v446, %v444
    %v653 = vpack.c.b16 %v449, %v447
    %v654 = vpack.c.b16 %v450, %v448
    %v655 = vpack.c.b16 %v453, %v451
    %v656 = vpack.c.b16 %v454, %v452
    %v657 = vpack.c.b16 %v457, %v455
    %v658 = vpack.c.b16 %v458, %v456
    %v659 = vpack.c.b16 %v461, %v459
    %v660 = vpack.c.b16 %v462, %v460
    %v661 = vpack.c.b16 %v465, %v463
    %v662 = vpack.c.b16 %v466, %v464
    %v663 = vpack.c.b16 %v469, %v467
    %v664 = vpack.c.b16 %v470, %v468
    %v665 = vpack.c.b16 %v473, %v471
    %v666 = vpack.c.b16 %v474, %v472
    %v667 = vpack.c.b16 %v477, %v475
    %v668 = vpack.c.b16 %v478, %v476
    %v669 = vpack.c.b16 %v481, %v479
    %v670 = vpack.c.b16 %v482, %v480
    %v671 = vpack.c.b16 %v485, %v483
    %v672 = vpack.c.b16 %v486, %v484
    %v673 = vpack.c.b16 %v489, %v487
    %v674 = vpack.c.b16 %v490, %v488
    %v675 = vpack.c.b16 %v493, %v491
    %v676 = vpack.c.b16 %v494, %v492
    %v677 = vpack.c.b16 %v497, %v495
    %v678 = vpack.c.b16 %v498, %v496
    %v679 = vpack.c.b16 %v501, %v499
    %v680 = vpack.c.b16 %v502, %v500
    %v681 = vpack.c.b16 %v505, %v503
    %v682 = vpack.c.b16 %v506, %v504
    %v683 = vpack.c.b16 %v509, %v507
    %v684 = vpack.c.b16 %v510, %v508
    %v685 = vpack.c.b16 %v513, %v511
    %v686 = vpack.c.b16 %v514, %v512
    %v687 = vpack.c.b16 %v517, %v515
    %v688 = vpack.c.b16 %v518, %v516
    %v689 = vpack.c.b16 %v521, %v519
    %v690 = vpack.c.b16 %v522, %v520
    %v691 = vpack.c.b16 %v525, %v523
    %v692 = vpack.c.b16 %v526, %v524
    %v693 = vpack.c.b16 %v529, %v527
    %v694 = vpack.c.b16 %v530, %v528
    %v695 = vpack.c.b16 %v533, %v531
    %v696 = vpack.c.b16 %v534, %v532
    %v697 = vpack.c.b16 %v537, %v535
    %v698 = vpack.c.b16 %v538, %v536
    %v699 = vpack.c.b16 %v541, %v539
    %v700 = vpack.c.b16 %v542, %v540
    %v701 = vpack.c.b16 %v545, %v543
    %v702 = vpack.c.b16 %v546, %v544
    %v703 = vpack.c.b16 %v549, %v547
    %v704 = vpack.c.b16 %v550, %v548
    %v705 = vpack.c.b16 %v553, %v551
    %v706 = vpack.c.b16 %v554, %v552
    %v707 = vpack.c.b16 %v557, %v555
    %v708 = vpack.c.b16 %v558, %v556
    %v709 = vpack.c.b16 %v561, %v559
    %v710 = vpack.c.b16 %v562, %v560
    %v711 = vpack.c.b16 %v565, %v563
    %v712 = vpack.c.b16 %v566, %v564
    %v713 = vpack.c.b16 %v569, %v567
    %v714 = vpack.c.b16 %v570, %v568
    %v715 = vpack.c.b16 %v573, %v571
    %v716 = vpack.c.b16 %v574, %v572
    %v717 = vpack.c.b16 %v577, %v575
    %v718 = vpack.c.b16 %v578, %v576
    %v719 = vpack.c.b16 %v581, %v579
    %v720 = vpack.c.b16 %v582, %v580
    %v721 = vpack.c.b16 %v585, %v583
    %v722 = vpack.c.b16 %v586, %v584
    %v723 = vpack.c.b16 %v589, %v587
    %v724 = vpack.c.b16 %v590, %v588
    %v725 = vpack.c.b16 %v593, %v591
    %v726 = vpack.c.b16 %v594, %v592
    %v727 = vpack.c.b16 %v597, %v595
    %v728 = vpack.c.b16 %v598, %v596
    %v729 = vpack.c.b16 %v601, %v599
    %v730 = vpack.c.b16 %v602, %v600
    %859 = vmatpush.bf16.msra.mxu0 %v617
    %860 = vmatpush.bf16.msra.mxu0 %v615
    %861 = vmatpush.bf16.msra.mxu0 %v613
    %862 = vmatpush.bf16.msra.mxu0 %v611
    %863 = vmatpush.bf16.msra.mxu0 %v609
    %864 = vmatpush.bf16.msra.mxu0 %v607
    %865 = vmatpush.bf16.msra.mxu0 %v605
    %866 = vmatpush.bf16.msra.mxu0 %v603
    %867 = vmatmul.bf16.gmra.mxu0 %v203
    %v868 = vpop.f32.mrf.mxu0
    %v869 = vadd.f32 %v189, %v868
    %v870 = vpop.f32.mrf.mxu0
    %871 = vdwg.mxu0
    %872 = vmatpush.bf16.msra.mxu0 %v633
    %873 = vmatpush.bf16.msra.mxu0 %v631
    %874 = vmatpush.bf16.msra.mxu0 %v629
    %875 = vmatpush.bf16.msra.mxu0 %v627
    %876 = vmatpush.bf16.msra.mxu0 %v625
    %877 = vmatpush.bf16.msra.mxu0 %v623
    %878 = vmatpush.bf16.msra.mxu0 %v621
    %879 = vmatpush.bf16.msra.mxu0 %v619
    %880 = vmatmul.bf16.gmra.mxu0 %v204
    %v881 = vpop.f32.mrf.mxu0
    %v882 = vadd.f32 %v869, %v881
    %v883 = vpop.f32.mrf.mxu0
    %884 = vdwg.mxu0
    %885 = vmatpush.bf16.msra.mxu0 %v649
    %886 = vmatpush.bf16.msra.mxu0 %v647
    %887 = vmatpush.bf16.msra.mxu0 %v645
    %888 = vmatpush.bf16.msra.mxu0 %v643
    %889 = vmatpush.bf16.msra.mxu0 %v641
    %890 = vmatpush.bf16.msra.mxu0 %v639
    %891 = vmatpush.bf16.msra.mxu0 %v637
    %892 = vmatpush.bf16.msra.mxu0 %v635
    %893 = vmatmul.bf16.gmra.mxu0 %v205
    %v894 = vpop.f32.mrf.mxu0
    %v895 = vadd.f32 %v882, %v894
    %v896 = vpop.f32.mrf.mxu0
    %897 = vdwg.mxu0
    %898 = vmatpush.bf16.msra.mxu0 %v665
    %899 = vmatpush.bf16.msra.mxu0 %v663
    %900 = vmatpush.bf16.msra.mxu0 %v661
    %901 = vmatpush.bf16.msra.mxu0 %v659
    %902 = vmatpush.bf16.msra.mxu0 %v657
    %903 = vmatpush.bf16.msra.mxu0 %v655
    %904 = vmatpush.bf16.msra.mxu0 %v653
    %905 = vmatpush.bf16.msra.mxu0 %v651
    %906 = vmatmul.bf16.gmra.mxu0 %v206
    %v907 = vpop.f32.mrf.mxu0
    %v908 = vadd.f32 %v895, %v907
    %v909 = vpop.f32.mrf.mxu0
    %910 = vdwg.mxu0
    %911 = vmatpush.bf16.msra.mxu0 %v681
    %912 = vmatpush.bf16.msra.mxu0 %v679
    %913 = vmatpush.bf16.msra.mxu0 %v677
    %914 = vmatpush.bf16.msra.mxu0 %v675
    %915 = vmatpush.bf16.msra.mxu0 %v673
    %916 = vmatpush.bf16.msra.mxu0 %v671
    %917 = vmatpush.bf16.msra.mxu0 %v669
    %918 = vmatpush.bf16.msra.mxu0 %v667
    %919 = vmatmul.bf16.gmra.mxu0 %v207
    %v920 = vpop.f32.mrf.mxu0
    %v921 = vadd.f32 %v908, %v920
    %v922 = vpop.f32.mrf.mxu0
    %923 = vdwg.mxu0
    %924 = vmatpush.bf16.msra.mxu0 %v697
    %925 = vmatpush.bf16.msra.mxu0 %v695
    %926 = vmatpush.bf16.msra.mxu0 %v693
    %927 = vmatpush.bf16.msra.mxu0 %v691
    %928 = vmatpush.bf16.msra.mxu0 %v689
    %929 = vmatpush.bf16.msra.mxu0 %v687
    %930 = vmatpush.bf16.msra.mxu0 %v685
    %931 = vmatpush.bf16.msra.mxu0 %v683
    %932 = vmatmul.bf16.gmra.mxu0 %v208
    %v933 = vpop.f32.mrf.mxu0
    %v934 = vadd.f32 %v921, %v933
    %v935 = vpop.f32.mrf.mxu0
    %936 = vdwg.mxu0
    %937 = vmatpush.bf16.msra.mxu0 %v713
    %938 = vmatpush.bf16.msra.mxu0 %v711
    %939 = vmatpush.bf16.msra.mxu0 %v709
    %940 = vmatpush.bf16.msra.mxu0 %v707
    %941 = vmatpush.bf16.msra.mxu0 %v705
    %942 = vmatpush.bf16.msra.mxu0 %v703
    %943 = vmatpush.bf16.msra.mxu0 %v701
    %944 = vmatpush.bf16.msra.mxu0 %v699
    %945 = vmatmul.bf16.gmra.mxu0 %v209
    %v946 = vpop.f32.mrf.mxu0
    %v947 = vadd.f32 %v934, %v946
    %v948 = vpop.f32.mrf.mxu0
    %949 = vdwg.mxu0
    %950 = vmatpush.bf16.msra.mxu0 %v729
    %951 = vmatpush.bf16.msra.mxu0 %v727
    %952 = vmatpush.bf16.msra.mxu0 %v725
    %953 = vmatpush.bf16.msra.mxu0 %v723
    %954 = vmatpush.bf16.msra.mxu0 %v721
    %955 = vmatpush.bf16.msra.mxu0 %v719
    %956 = vmatpush.bf16.msra.mxu0 %v717
    %957 = vmatpush.bf16.msra.mxu0 %v715
    %958 = vmatmul.bf16.gmra.mxu0 %v210
    %v959 = vpop.f32.mrf.mxu0
    %v960 = vadd.f32 %v947, %v959
    %v961 = vpop.f32.mrf.mxu0
    %962 = vdwg.mxu0
    %963 = vmatpush.bf16.msra.mxu0 %v618
    %964 = vmatpush.bf16.msra.mxu0 %v616
    %965 = vmatpush.bf16.msra.mxu0 %v614
    %966 = vmatpush.bf16.msra.mxu0 %v612
    %967 = vmatpush.bf16.msra.mxu0 %v610
    %968 = vmatpush.bf16.msra.mxu0 %v608
    %969 = vmatpush.bf16.msra.mxu0 %v606
    %970 = vmatpush.bf16.msra.mxu0 %v604
    %971 = vmatmul.bf16.gmra.mxu0 %v203
    %v972 = vpop.f32.mrf.mxu0
    %v973 = vadd.f32 %v190, %v972
    %v974 = vpop.f32.mrf.mxu0
    %975 = vdwg.mxu0
    %976 = vmatpush.bf16.msra.mxu0 %v634
    %977 = vmatpush.bf16.msra.mxu0 %v632
    %978 = vmatpush.bf16.msra.mxu0 %v630
    %979 = vmatpush.bf16.msra.mxu0 %v628
    %980 = vmatpush.bf16.msra.mxu0 %v626
    %981 = vmatpush.bf16.msra.mxu0 %v624
    %982 = vmatpush.bf16.msra.mxu0 %v622
    %983 = vmatpush.bf16.msra.mxu0 %v620
    %984 = vmatmul.bf16.gmra.mxu0 %v204
    %v985 = vpop.f32.mrf.mxu0
    %v986 = vadd.f32 %v973, %v985
    %v987 = vpop.f32.mrf.mxu0
    %988 = vdwg.mxu0
    %989 = vmatpush.bf16.msra.mxu0 %v650
    %990 = vmatpush.bf16.msra.mxu0 %v648
    %991 = vmatpush.bf16.msra.mxu0 %v646
    %992 = vmatpush.bf16.msra.mxu0 %v644
    %993 = vmatpush.bf16.msra.mxu0 %v642
    %994 = vmatpush.bf16.msra.mxu0 %v640
    %995 = vmatpush.bf16.msra.mxu0 %v638
    %996 = vmatpush.bf16.msra.mxu0 %v636
    %997 = vmatmul.bf16.gmra.mxu0 %v205
    %v998 = vpop.f32.mrf.mxu0
    %v999 = vadd.f32 %v986, %v998
    %v1000 = vpop.f32.mrf.mxu0
    %1001 = vdwg.mxu0
    %1002 = vmatpush.bf16.msra.mxu0 %v666
    %1003 = vmatpush.bf16.msra.mxu0 %v664
    %1004 = vmatpush.bf16.msra.mxu0 %v662
    %1005 = vmatpush.bf16.msra.mxu0 %v660
    %1006 = vmatpush.bf16.msra.mxu0 %v658
    %1007 = vmatpush.bf16.msra.mxu0 %v656
    %1008 = vmatpush.bf16.msra.mxu0 %v654
    %1009 = vmatpush.bf16.msra.mxu0 %v652
    %1010 = vmatmul.bf16.gmra.mxu0 %v206
    %v1011 = vpop.f32.mrf.mxu0
    %v1012 = vadd.f32 %v999, %v1011
    %v1013 = vpop.f32.mrf.mxu0
    %1014 = vdwg.mxu0
    %1015 = vmatpush.bf16.msra.mxu0 %v682
    %1016 = vmatpush.bf16.msra.mxu0 %v680
    %1017 = vmatpush.bf16.msra.mxu0 %v678
    %1018 = vmatpush.bf16.msra.mxu0 %v676
    %1019 = vmatpush.bf16.msra.mxu0 %v674
    %1020 = vmatpush.bf16.msra.mxu0 %v672
    %1021 = vmatpush.bf16.msra.mxu0 %v670
    %1022 = vmatpush.bf16.msra.mxu0 %v668
    %1023 = vmatmul.bf16.gmra.mxu0 %v207
    %v1024 = vpop.f32.mrf.mxu0
    %v1025 = vadd.f32 %v1012, %v1024
    %v1026 = vpop.f32.mrf.mxu0
    %1027 = vdwg.mxu0
    %1028 = vmatpush.bf16.msra.mxu0 %v698
    %1029 = vmatpush.bf16.msra.mxu0 %v696
    %1030 = vmatpush.bf16.msra.mxu0 %v694
    %1031 = vmatpush.bf16.msra.mxu0 %v692
    %1032 = vmatpush.bf16.msra.mxu0 %v690
    %1033 = vmatpush.bf16.msra.mxu0 %v688
    %1034 = vmatpush.bf16.msra.mxu0 %v686
    %1035 = vmatpush.bf16.msra.mxu0 %v684
    %1036 = vmatmul.bf16.gmra.mxu0 %v208
    %v1037 = vpop.f32.mrf.mxu0
    %v1038 = vadd.f32 %v1025, %v1037
    %v1039 = vpop.f32.mrf.mxu0
    %1040 = vdwg.mxu0
    %1041 = vmatpush.bf16.msra.mxu0 %v714
    %1042 = vmatpush.bf16.msra.mxu0 %v712
    %1043 = vmatpush.bf16.msra.mxu0 %v710
    %1044 = vmatpush.bf16.msra.mxu0 %v708
    %1045 = vmatpush.bf16.msra.mxu0 %v706
    %1046 = vmatpush.bf16.msra.mxu0 %v704
    %1047 = vmatpush.bf16.msra.mxu0 %v702
    %1048 = vmatpush.bf16.msra.mxu0 %v700
    %1049 = vmatmul.bf16.gmra.mxu0 %v209
    %v1050 = vpop.f32.mrf.mxu0
    %v1051 = vadd.f32 %v1038, %v1050
    %v1052 = vpop.f32.mrf.mxu0
    %1053 = vdwg.mxu0
    %1054 = vmatpush.bf16.msra.mxu0 %v730
    %1055 = vmatpush.bf16.msra.mxu0 %v728
    %1056 = vmatpush.bf16.msra.mxu0 %v726
    %1057 = vmatpush.bf16.msra.mxu0 %v724
    %1058 = vmatpush.bf16.msra.mxu0 %v722
    %1059 = vmatpush.bf16.msra.mxu0 %v720
    %1060 = vmatpush.bf16.msra.mxu0 %v718
    %1061 = vmatpush.bf16.msra.mxu0 %v716
    %1062 = vmatmul.bf16.gmra.mxu0 %v210
    %v1063 = vpop.f32.mrf.mxu0
    %v1064 = vadd.f32 %v1051, %v1063
    %v1065 = vpop.f32.mrf.mxu0
    %1066 = vdwg.mxu0
    %v1067 = vmul.f32 %v1064, 0.5
    %v1068 = vmul.f32 %v1067, 1.442695
    %v1069 = vpow.pop %v1068
    %v1070 = vld [vmem:[%s3] sm:$0xff]
    %v1071 = vmul.f32 %v1069, %v1070
    %v1072 = vadd.f32 %v960, %v1071
    %v1073 = vpack.c.bf16 %v1072, %v1072
    %v1074 = vld [vmem:[#allocation4] sm:$0xff]
    %v1075 = vld [vmem:[#allocation4 + $0x8] sm:$0xff]
    %v1076 = vld [vmem:[#allocation4 + $0x10] sm:$0xff]
    %v1077 = vld [vmem:[#allocation4 + $0x18] sm:$0xff]
    %v1078 = vld [vmem:[#allocation4 + $0x20] sm:$0xff]
    %v1079 = vld [vmem:[#allocation4 + $0x28] sm:$0xff]
    %v1080 = vld [vmem:[#allocation4 + $0x30] sm:$0xff]
    %v1081 = vld [vmem:[#allocation4 + $0x38] sm:$0xff]
    %v1082 = vld [vmem:[#allocation4 + $0x40] sm:$0xff]
    %v1083 = vld [vmem:[#allocation4 + $0x48] sm:$0xff]
    %v1084 = vld [vmem:[#allocation4 + $0x50] sm:$0xff]
    %v1085 = vld [vmem:[#allocation4 + $0x58] sm:$0xff]
    %v1086 = vld [vmem:[#allocation4 + $0x60] sm:$0xff]
    %v1087 = vld [vmem:[#allocation4 + $0x68] sm:$0xff]
    %v1088 = vld [vmem:[#allocation4 + $0x70] sm:$0xff]
    %v1089 = vld [vmem:[#allocation4 + $0x78] sm:$0xff]
    %v1090 = vld [vmem:[#allocation4 + $0x80] sm:$0xff]
    %v1091 = vld [vmem:[#allocation4 + $0x88] sm:$0xff]
    %v1092 = vld [vmem:[#allocation4 + $0x90] sm:$0xff]
    %v1093 = vld [vmem:[#allocation4 + $0x98] sm:$0xff]
    %v1094 = vld [vmem:[#allocation4 + $0xa0] sm:$0xff]
    %v1095 = vld [vmem:[#allocation4 + $0xa8] sm:$0xff]
    %v1096 = vld [vmem:[#allocation4 + $0xb0] sm:$0xff]
    %v1097 = vld [vmem:[#allocation4 + $0xb8] sm:$0xff]
    %v1098 = vld [vmem:[#allocation4 + $0xc0] sm:$0xff]
    %v1099 = vld [vmem:[#allocation4 + $0xc8] sm:$0xff]
    %v1100 = vld [vmem:[#allocation4 + $0xd0] sm:$0xff]
    %v1101 = vld [vmem:[#allocation4 + $0xd8] sm:$0xff]
    %v1102 = vld [vmem:[#allocation4 + $0xe0] sm:$0xff]
    %v1103 = vld [vmem:[#allocation4 + $0xe8] sm:$0xff]
    %v1104 = vld [vmem:[#allocation4 + $0xf0] sm:$0xff]
    %v1105 = vld [vmem:[#allocation4 + $0xf8] sm:$0xff]
    %v1106 = vld [vmem:[#allocation4 + $0x100] sm:$0xff]
    %v1107 = vld [vmem:[#allocation4 + $0x108] sm:$0xff]
    %v1108 = vld [vmem:[#allocation4 + $0x110] sm:$0xff]
    %v1109 = vld [vmem:[#allocation4 + $0x118] sm:$0xff]
    %v1110 = vld [vmem:[#allocation4 + $0x120] sm:$0xff]
    %v1111 = vld [vmem:[#allocation4 + $0x128] sm:$0xff]
    %v1112 = vld [vmem:[#allocation4 + $0x130] sm:$0xff]
    %v1113 = vld [vmem:[#allocation4 + $0x138] sm:$0xff]
    %v1114 = vld [vmem:[#allocation4 + $0x140] sm:$0xff]
    %v1115 = vld [vmem:[#allocation4 + $0x148] sm:$0xff]
    %v1116 = vld [vmem:[#allocation4 + $0x150] sm:$0xff]
    %v1117 = vld [vmem:[#allocation4 + $0x158] sm:$0xff]
    %v1118 = vld [vmem:[#allocation4 + $0x160] sm:$0xff]
    %v1119 = vld [vmem:[#allocation4 + $0x168] sm:$0xff]
    %v1120 = vld [vmem:[#allocation4 + $0x170] sm:$0xff]
    %v1121 = vld [vmem:[#allocation4 + $0x178] sm:$0xff]
    %v1122 = vld [vmem:[#allocation4 + $0x180] sm:$0xff]
    %v1123 = vld [vmem:[#allocation4 + $0x188] sm:$0xff]
    %v1124 = vld [vmem:[#allocation4 + $0x190] sm:$0xff]
    %v1125 = vld [vmem:[#allocation4 + $0x198] sm:$0xff]
    %v1126 = vld [vmem:[#allocation4 + $0x1a0] sm:$0xff]
    %v1127 = vld [vmem:[#allocation4 + $0x1a8] sm:$0xff]
    %v1128 = vld [vmem:[#allocation4 + $0x1b0] sm:$0xff]
    %v1129 = vld [vmem:[#allocation4 + $0x1b8] sm:$0xff]
    %v1130 = vld [vmem:[#allocation4 + $0x1c0] sm:$0xff]
    %v1131 = vld [vmem:[#allocation4 + $0x1c8] sm:$0xff]
    %v1132 = vld [vmem:[#allocation4 + $0x1d0] sm:$0xff]
    %v1133 = vld [vmem:[#allocation4 + $0x1d8] sm:$0xff]
    %v1134 = vld [vmem:[#allocation4 + $0x1e0] sm:$0xff]
    %v1135 = vld [vmem:[#allocation4 + $0x1e8] sm:$0xff]
    %v1136 = vld [vmem:[#allocation4 + $0x1f0] sm:$0xff]
    %v1137 = vld [vmem:[#allocation4 + $0x1f8] sm:$0xff]
    %v1138 = vld [vmem:[%s5] sm:$0xff]
    %v1139 = vld [vmem:[%s5 + $0x8] sm:$0xff]
    %v1140 = vld [vmem:[%s5 + $0x10] sm:$0xff]
    %v1141 = vld [vmem:[%s5 + $0x18] sm:$0xff]
    %v1142 = vld [vmem:[%s5 + $0x20] sm:$0xff]
    %v1143 = vld [vmem:[%s5 + $0x28] sm:$0xff]
    %v1144 = vld [vmem:[%s5 + $0x30] sm:$0xff]
    %v1145 = vld [vmem:[%s5 + $0x38] sm:$0xff]
    %v1210 = vunpack.c.l.b16 %v1074
    %v1211 = vunpack.c.h.b16 %v1074
    %v1212 = vunpack.c.l.b16 %v1075
    %v1213 = vunpack.c.h.b16 %v1075
    %v1214 = vunpack.c.l.b16 %v1076
    %v1215 = vunpack.c.h.b16 %v1076
    %v1216 = vunpack.c.l.b16 %v1077
    %v1217 = vunpack.c.h.b16 %v1077
    %v1218 = vunpack.c.l.b16 %v1078
    %v1219 = vunpack.c.h.b16 %v1078
    %v1220 = vunpack.c.l.b16 %v1079
    %v1221 = vunpack.c.h.b16 %v1079
    %v1222 = vunpack.c.l.b16 %v1080
    %v1223 = vunpack.c.h.b16 %v1080
    %v1224 = vunpack.c.l.b16 %v1081
    %v1225 = vunpack.c.h.b16 %v1081
    %v1226 = vunpack.c.l.b16 %v1082
    %v1227 = vunpack.c.h.b16 %v1082
    %v1228 = vunpack.c.l.b16 %v1083
    %v1229 = vunpack.c.h.b16 %v1083
    %v1230 = vunpack.c.l.b16 %v1084
    %v1231 = vunpack.c.h.b16 %v1084
    %v1232 = vunpack.c.l.b16 %v1085
    %v1233 = vunpack.c.h.b16 %v1085
    %v1234 = vunpack.c.l.b16 %v1086
    %v1235 = vunpack.c.h.b16 %v1086
    %v1236 = vunpack.c.l.b16 %v1087
    %v1237 = vunpack.c.h.b16 %v1087
    %v1238 = vunpack.c.l.b16 %v1088
    %v1239 = vunpack.c.h.b16 %v1088
    %v1240 = vunpack.c.l.b16 %v1089
    %v1241 = vunpack.c.h.b16 %v1089
    %v1242 = vunpack.c.l.b16 %v1090
    %v1243 = vunpack.c.h.b16 %v1090
    %v1244 = vunpack.c.l.b16 %v1091
    %v1245 = vunpack.c.h.b16 %v1091
    %v1246 = vunpack.c.l.b16 %v1092
    %v1247 = vunpack.c.h.b16 %v1092
    %v1248 = vunpack.c.l.b16 %v1093
    %v1249 = vunpack.c.h.b16 %v1093
    %v1250 = vunpack.c.l.b16 %v1094
    %v1251 = vunpack.c.h.b16 %v1094
    %v1252 = vunpack.c.l.b16 %v1095
    %v1253 = vunpack.c.h.b16 %v1095
    %v1254 = vunpack.c.l.b16 %v1096
    %v1255 = vunpack.c.h.b16 %v1096
    %v1256 = vunpack.c.l.b16 %v1097
    %v1257 = vunpack.c.h.b16 %v1097
    %v1258 = vunpack.c.l.b16 %v1098
    %v1259 = vunpack.c.h.b16 %v1098
    %v1260 = vunpack.c.l.b16 %v1099
    %v1261 = vunpack.c.h.b16 %v1099
    %v1262 = vunpack.c.l.b16 %v1100
    %v1263 = vunpack.c.h.b16 %v1100
    %v1264 = vunpack.c.l.b16 %v1101
    %v1265 = vunpack.c.h.b16 %v1101
    %v1266 = vunpack.c.l.b16 %v1102
    %v1267 = vunpack.c.h.b16 %v1102
    %v1268 = vunpack.c.l.b16 %v1103
    %v1269 = vunpack.c.h.b16 %v1103
    %v1270 = vunpack.c.l.b16 %v1104
    %v1271 = vunpack.c.h.b16 %v1104
    %v1272 = vunpack.c.l.b16 %v1105
    %v1273 = vunpack.c.h.b16 %v1105
    %v1274 = vunpack.c.l.b16 %v1106
    %v1275 = vunpack.c.h.b16 %v1106
    %v1276 = vunpack.c.l.b16 %v1107
    %v1277 = vunpack.c.h.b16 %v1107
    %v1278 = vunpack.c.l.b16 %v1108
    %v1279 = vunpack.c.h.b16 %v1108
    %v1280 = vunpack.c.l.b16 %v1109
    %v1281 = vunpack.c.h.b16 %v1109
    %v1282 = vunpack.c.l.b16 %v1110
    %v1283 = vunpack.c.h.b16 %v1110
    %v1284 = vunpack.c.l.b16 %v1111
    %v1285 = vunpack.c.h.b16 %v1111
    %v1286 = vunpack.c.l.b16 %v1112
    %v1287 = vunpack.c.h.b16 %v1112
    %v1288 = vunpack.c.l.b16 %v1113
    %v1289 = vunpack.c.h.b16 %v1113
    %v1290 = vunpack.c.l.b16 %v1114
    %v1291 = vunpack.c.h.b16 %v1114
    %v1292 = vunpack.c.l.b16 %v1115
    %v1293 = vunpack.c.h.b16 %v1115
    %v1294 = vunpack.c.l.b16 %v1116
    %v1295 = vunpack.c.h.b16 %v1116
    %v1296 = vunpack.c.l.b16 %v1117
    %v1297 = vunpack.c.h.b16 %v1117
    %v1298 = vunpack.c.l.b16 %v1118
    %v1299 = vunpack.c.h.b16 %v1118
    %v1300 = vunpack.c.l.b16 %v1119
    %v1301 = vunpack.c.h.b16 %v1119
    %v1302 = vunpack.c.l.b16 %v1120
    %v1303 = vunpack.c.h.b16 %v1120
    %v1304 = vunpack.c.l.b16 %v1121
    %v1305 = vunpack.c.h.b16 %v1121
    %v1306 = vunpack.c.l.b16 %v1122
    %v1307 = vunpack.c.h.b16 %v1122
    %v1308 = vunpack.c.l.b16 %v1123
    %v1309 = vunpack.c.h.b16 %v1123
    %v1310 = vunpack.c.l.b16 %v1124
    %v1311 = vunpack.c.h.b16 %v1124
    %v1312 = vunpack.c.l.b16 %v1125
    %v1313 = vunpack.c.h.b16 %v1125
    %v1314 = vunpack.c.l.b16 %v1126
    %v1315 = vunpack.c.h.b16 %v1126
    %v1316 = vunpack.c.l.b16 %v1127
    %v1317 = vunpack.c.h.b16 %v1127
    %v1318 = vunpack.c.l.b16 %v1128
    %v1319 = vunpack.c.h.b16 %v1128
    %v1320 = vunpack.c.l.b16 %v1129
    %v1321 = vunpack.c.h.b16 %v1129
    %v1322 = vunpack.c.l.b16 %v1130
    %v1323 = vunpack.c.h.b16 %v1130
    %v1324 = vunpack.c.l.b16 %v1131
    %v1325 = vunpack.c.h.b16 %v1131
    %v1326 = vunpack.c.l.b16 %v1132
    %v1327 = vunpack.c.h.b16 %v1132
    %v1328 = vunpack.c.l.b16 %v1133
    %v1329 = vunpack.c.h.b16 %v1133
    %v1330 = vunpack.c.l.b16 %v1134
    %v1331 = vunpack.c.h.b16 %v1134
    %v1332 = vunpack.c.l.b16 %v1135
    %v1333 = vunpack.c.h.b16 %v1135
    %v1334 = vunpack.c.l.b16 %v1136
    %v1335 = vunpack.c.h.b16 %v1136
    %v1336 = vunpack.c.l.b16 %v1137
    %v1337 = vunpack.c.h.b16 %v1137
    %v1338 = vpack.c.b16 %v1218, %v1210
    %v1339 = vpack.c.b16 %v1219, %v1211
    %v1340 = vpack.c.b16 %v1220, %v1212
    %v1341 = vpack.c.b16 %v1221, %v1213
    %v1342 = vpack.c.b16 %v1222, %v1214
    %v1343 = vpack.c.b16 %v1223, %v1215
    %v1344 = vpack.c.b16 %v1224, %v1216
    %v1345 = vpack.c.b16 %v1225, %v1217
    %v1346 = vpack.c.b16 %v1234, %v1226
    %v1347 = vpack.c.b16 %v1235, %v1227
    %v1348 = vpack.c.b16 %v1236, %v1228
    %v1349 = vpack.c.b16 %v1237, %v1229
    %v1350 = vpack.c.b16 %v1238, %v1230
    %v1351 = vpack.c.b16 %v1239, %v1231
    %v1352 = vpack.c.b16 %v1240, %v1232
    %v1353 = vpack.c.b16 %v1241, %v1233
    %v1354 = vpack.c.b16 %v1250, %v1242
    %v1355 = vpack.c.b16 %v1251, %v1243
    %v1356 = vpack.c.b16 %v1252, %v1244
    %v1357 = vpack.c.b16 %v1253, %v1245
    %v1358 = vpack.c.b16 %v1254, %v1246
    %v1359 = vpack.c.b16 %v1255, %v1247
    %v1360 = vpack.c.b16 %v1256, %v1248
    %v1361 = vpack.c.b16 %v1257, %v1249
    %v1362 = vpack.c.b16 %v1266, %v1258
    %v1363 = vpack.c.b16 %v1267, %v1259
    %v1364 = vpack.c.b16 %v1268, %v1260
    %v1365 = vpack.c.b16 %v1269, %v1261
    %v1366 = vpack.c.b16 %v1270, %v1262
    %v1367 = vpack.c.b16 %v1271, %v1263
    %v1368 = vpack.c.b16 %v1272, %v1264
    %v1369 = vpack.c.b16 %v1273, %v1265
    %v1370 = vpack.c.b16 %v1282, %v1274
    %v1371 = vpack.c.b16 %v1283, %v1275
    %v1372 = vpack.c.b16 %v1284, %v1276
    %v1373 = vpack.c.b16 %v1285, %v1277
    %v1374 = vpack.c.b16 %v1286, %v1278
    %v1375 = vpack.c.b16 %v1287, %v1279
    %v1376 = vpack.c.b16 %v1288, %v1280
    %v1377 = vpack.c.b16 %v1289, %v1281
    %v1378 = vpack.c.b16 %v1298, %v1290
    %v1379 = vpack.c.b16 %v1299, %v1291
    %v1380 = vpack.c.b16 %v1300, %v1292
    %v1381 = vpack.c.b16 %v1301, %v1293
    %v1382 = vpack.c.b16 %v1302, %v1294
    %v1383 = vpack.c.b16 %v1303, %v1295
    %v1384 = vpack.c.b16 %v1304, %v1296
    %v1385 = vpack.c.b16 %v1305, %v1297
    %v1386 = vpack.c.b16 %v1314, %v1306
    %v1387 = vpack.c.b16 %v1315, %v1307
    %v1388 = vpack.c.b16 %v1316, %v1308
    %v1389 = vpack.c.b16 %v1317, %v1309
    %v1390 = vpack.c.b16 %v1318, %v1310
    %v1391 = vpack.c.b16 %v1319, %v1311
    %v1392 = vpack.c.b16 %v1320, %v1312
    %v1393 = vpack.c.b16 %v1321, %v1313
    %v1394 = vpack.c.b16 %v1330, %v1322
    %v1395 = vpack.c.b16 %v1331, %v1323
    %v1396 = vpack.c.b16 %v1332, %v1324
    %v1397 = vpack.c.b16 %v1333, %v1325
    %v1398 = vpack.c.b16 %v1334, %v1326
    %v1399 = vpack.c.b16 %v1335, %v1327
    %v1400 = vpack.c.b16 %v1336, %v1328
    %v1401 = vpack.c.b16 %v1337, %v1329
    %1466 = vmatpush.bf16.msra.mxu0 %v1394
    %1467 = vmatpush.bf16.msra.mxu0 %v1386
    %1468 = vmatpush.bf16.msra.mxu0 %v1378
    %1469 = vmatpush.bf16.msra.mxu0 %v1370
    %1470 = vmatpush.bf16.msra.mxu0 %v1362
    %1471 = vmatpush.bf16.msra.mxu0 %v1354
    %1472 = vmatpush.bf16.msra.mxu0 %v1346
    %1473 = vmatpush.bf16.msra.mxu0 %v1338
    %1474 = vmatmul.bf16.gmra.mxu0 %v1073
    %v1475 = vpop.f32.mrf.mxu0
    %v1476 = vadd.f32 %v1138, %v1475
    %v1477 = vpop.f32.mrf.mxu0
    %1478 = vdwg.mxu0
    %1479 = vmatpush.bf16.msra.mxu0 %v1395
    %1480 = vmatpush.bf16.msra.mxu0 %v1387
    %1481 = vmatpush.bf16.msra.mxu0 %v1379
    %1482 = vmatpush.bf16.msra.mxu0 %v1371
    %1483 = vmatpush.bf16.msra.mxu0 %v1363
    %1484 = vmatpush.bf16.msra.mxu0 %v1355
    %1485 = vmatpush.bf16.msra.mxu0 %v1347
    %1486 = vmatpush.bf16.msra.mxu0 %v1339
    %1487 = vmatmul.bf16.gmra.mxu0 %v1073
    %v1488 = vpop.f32.mrf.mxu0
    %v1489 = vadd.f32 %v1139, %v1488
    %v1490 = vpop.f32.mrf.mxu0
    %1491 = vdwg.mxu0
    %1492 = vmatpush.bf16.msra.mxu0 %v1396
    %1493 = vmatpush.bf16.msra.mxu0 %v1388
    %1494 = vmatpush.bf16.msra.mxu0 %v1380
    %1495 = vmatpush.bf16.msra.mxu0 %v1372
    %1496 = vmatpush.bf16.msra.mxu0 %v1364
    %1497 = vmatpush.bf16.msra.mxu0 %v1356
    %1498 = vmatpush.bf16.msra.mxu0 %v1348
    %1499 = vmatpush.bf16.msra.mxu0 %v1340
    %1500 = vmatmul.bf16.gmra.mxu0 %v1073
    %v1501 = vpop.f32.mrf.mxu0
    %v1502 = vadd.f32 %v1140, %v1501
    %v1503 = vpop.f32.mrf.mxu0
    %1504 = vdwg.mxu0
    %1505 = vmatpush.bf16.msra.mxu0 %v1397
    %1506 = vmatpush.bf16.msra.mxu0 %v1389
    %1507 = vmatpush.bf16.msra.mxu0 %v1381
    %1508 = vmatpush.bf16.msra.mxu0 %v1373
    %1509 = vmatpush.bf16.msra.mxu0 %v1365
    %1510 = vmatpush.bf16.msra.mxu0 %v1357
    %1511 = vmatpush.bf16.msra.mxu0 %v1349
    %1512 = vmatpush.bf16.msra.mxu0 %v1341
    %1513 = vmatmul.bf16.gmra.mxu0 %v1073
    %v1514 = vpop.f32.mrf.mxu0
    %v1515 = vadd.f32 %v1141, %v1514
    %v1516 = vpop.f32.mrf.mxu0
    %1517 = vdwg.mxu0
    %1518 = vmatpush.bf16.msra.mxu0 %v1398
    %1519 = vmatpush.bf16.msra.mxu0 %v1390
    %1520 = vmatpush.bf16.msra.mxu0 %v1382
    %1521 = vmatpush.bf16.msra.mxu0 %v1374
    %1522 = vmatpush.bf16.msra.mxu0 %v1366
    %1523 = vmatpush.bf16.msra.mxu0 %v1358
    %1524 = vmatpush.bf16.msra.mxu0 %v1350
    %1525 = vmatpush.bf16.msra.mxu0 %v1342
    %1526 = vmatmul.bf16.gmra.mxu0 %v1073
    %v1527 = vpop.f32.mrf.mxu0
    %v1528 = vadd.f32 %v1142, %v1527
    %v1529 = vpop.f32.mrf.mxu0
    %1530 = vdwg.mxu0
    %1531 = vmatpush.bf16.msra.mxu0 %v1399
    %1532 = vmatpush.bf16.msra.mxu0 %v1391
    %1533 = vmatpush.bf16.msra.mxu0 %v1383
    %1534 = vmatpush.bf16.msra.mxu0 %v1375
    %1535 = vmatpush.bf16.msra.mxu0 %v1367
    %1536 = vmatpush.bf16.msra.mxu0 %v1359
    %1537 = vmatpush.bf16.msra.mxu0 %v1351
    %1538 = vmatpush.bf16.msra.mxu0 %v1343
    %1539 = vmatmul.bf16.gmra.mxu0 %v1073
    %v1540 = vpop.f32.mrf.mxu0
    %v1541 = vadd.f32 %v1143, %v1540
    %v1542 = vpop.f32.mrf.mxu0
    %1543 = vdwg.mxu0
    %1544 = vmatpush.bf16.msra.mxu0 %v1400
    %1545 = vmatpush.bf16.msra.mxu0 %v1392
    %1546 = vmatpush.bf16.msra.mxu0 %v1384
    %1547 = vmatpush.bf16.msra.mxu0 %v1376
    %1548 = vmatpush.bf16.msra.mxu0 %v1368
    %1549 = vmatpush.bf16.msra.mxu0 %v1360
    %1550 = vmatpush.bf16.msra.mxu0 %v1352
    %1551 = vmatpush.bf16.msra.mxu0 %v1344
    %1552 = vmatmul.bf16.gmra.mxu0 %v1073
    %v1553 = vpop.f32.mrf.mxu0
    %v1554 = vadd.f32 %v1144, %v1553
    %v1555 = vpop.f32.mrf.mxu0
    %1556 = vdwg.mxu0
    %1557 = vmatpush.bf16.msra.mxu0 %v1401
    %1558 = vmatpush.bf16.msra.mxu0 %v1393
    %1559 = vmatpush.bf16.msra.mxu0 %v1385
    %1560 = vmatpush.bf16.msra.mxu0 %v1377
    %1561 = vmatpush.bf16.msra.mxu0 %v1369
    %1562 = vmatpush.bf16.msra.mxu0 %v1361
    %1563 = vmatpush.bf16.msra.mxu0 %v1353
    %1564 = vmatpush.bf16.msra.mxu0 %v1345
    %1565 = vmatmul.bf16.gmra.mxu0 %v1073
    %v1566 = vpop.f32.mrf.mxu0
    %v1567 = vadd.f32 %v1145, %v1566
    %v1568 = vpop.f32.mrf.mxu0
    %1569 = vdwg.mxu0
    %v1570 = vxor.u32 %v1476, 2147483648
    %v1571 = vxor.u32 %v1489, 2147483648
    %v1572 = vxor.u32 %v1502, 2147483648
    %v1573 = vxor.u32 %v1515, 2147483648
    %v1574 = vxor.u32 %v1528, 2147483648
    %v1575 = vxor.u32 %v1541, 2147483648
    %v1576 = vxor.u32 %v1554, 2147483648
    %v1577 = vxor.u32 %v1567, 2147483648
    %v1578 = vmul.f32 %v1570, 1.442695
    %v1579 = vpow.pop %v1578
    %v1580 = vmul.f32 %v1571, 1.442695
    %v1581 = vpow.pop %v1580
    %v1582 = vmul.f32 %v1572, 1.442695
    %v1583 = vpow.pop %v1582
    %v1584 = vmul.f32 %v1573, 1.442695
    %v1585 = vpow.pop %v1584
    %v1586 = vmul.f32 %v1574, 1.442695
    %v1587 = vpow.pop %v1586
    %v1588 = vmul.f32 %v1575, 1.442695
    %v1589 = vpow.pop %v1588
    %v1590 = vmul.f32 %v1576, 1.442695
    %v1591 = vpow.pop %v1590
    %v1592 = vmul.f32 %v1577, 1.442695
    %v1593 = vpow.pop %v1592
    %v1594 = vadd.f32 %v1579, 1.0
    %v1595 = vadd.f32 %v1581, 1.0
    %v1596 = vadd.f32 %v1583, 1.0
    %v1597 = vadd.f32 %v1585, 1.0
    %v1598 = vadd.f32 %v1587, 1.0
    %v1599 = vadd.f32 %v1589, 1.0
    %v1600 = vadd.f32 %v1591, 1.0
    %v1601 = vadd.f32 %v1593, 1.0
    %v1602 = vrcp.pop %v1594
    %v1603 = vmul.f32 %v1594, %v1602
    %v1604 = vsub.f32 1.0, %v1603
    %v1605 = vmul.f32 %v1602, %v1604
    %v1606 = vadd.f32 %v1602, %v1605
    %vm1607 = vweird.f32 %v1594
    %vm1608 = vweird.f32 %v1602
    %vm1609 = vmor %vm1607, %vm1608
    %v1610 = vsel %vm1609, %v1602, %v1606
    %v1611 = vand.u32 2147483647, %v1594
    %vm1612 = vcmp.eq.f32.partialorder %v1611, 8.507059e+37
    %v1613 = vand.u32 %v1594, 2147483648
    %v1614 = vor.u32 1.1754944e-38, %v1613
    %v1615 = vsel %vm1612, %v1614, %v1610
    %v1616 = vmul.f32 1.0, %v1615
    %v1617 = vrcp.pop %v1595
    %v1618 = vmul.f32 %v1595, %v1617
    %v1619 = vsub.f32 1.0, %v1618
    %v1620 = vmul.f32 %v1617, %v1619
    %v1621 = vadd.f32 %v1617, %v1620
    %vm1622 = vweird.f32 %v1595
    %vm1623 = vweird.f32 %v1617
    %vm1624 = vmor %vm1622, %vm1623
    %v1625 = vsel %vm1624, %v1617, %v1621
    %v1626 = vand.u32 2147483647, %v1595
    %vm1627 = vcmp.eq.f32.partialorder %v1626, 8.507059e+37
    %v1628 = vand.u32 %v1595, 2147483648
    %v1629 = vor.u32 1.1754944e-38, %v1628
    %v1630 = vsel %vm1627, %v1629, %v1625
    %v1631 = vmul.f32 1.0, %v1630
    %v1632 = vrcp.pop %v1596
    %v1633 = vmul.f32 %v1596, %v1632
    %v1634 = vsub.f32 1.0, %v1633
    %v1635 = vmul.f32 %v1632, %v1634
    %v1636 = vadd.f32 %v1632, %v1635
    %vm1637 = vweird.f32 %v1596
    %vm1638 = vweird.f32 %v1632
    %vm1639 = vmor %vm1637, %vm1638
    %v1640 = vsel %vm1639, %v1632, %v1636
    %v1641 = vand.u32 2147483647, %v1596
    %vm1642 = vcmp.eq.f32.partialorder %v1641, 8.507059e+37
    %v1643 = vand.u32 %v1596, 2147483648
    %v1644 = vor.u32 1.1754944e-38, %v1643
    %v1645 = vsel %vm1642, %v1644, %v1640
    %v1646 = vmul.f32 1.0, %v1645
    %v1647 = vrcp.pop %v1597
    %v1648 = vmul.f32 %v1597, %v1647
    %v1649 = vsub.f32 1.0, %v1648
    %v1650 = vmul.f32 %v1647, %v1649
    %v1651 = vadd.f32 %v1647, %v1650
    %vm1652 = vweird.f32 %v1597
    %vm1653 = vweird.f32 %v1647
    %vm1654 = vmor %vm1652, %vm1653
    %v1655 = vsel %vm1654, %v1647, %v1651
    %v1656 = vand.u32 2147483647, %v1597
    %vm1657 = vcmp.eq.f32.partialorder %v1656, 8.507059e+37
    %v1658 = vand.u32 %v1597, 2147483648
    %v1659 = vor.u32 1.1754944e-38, %v1658
    %v1660 = vsel %vm1657, %v1659, %v1655
    %v1661 = vmul.f32 1.0, %v1660
    %v1662 = vrcp.pop %v1598
    %v1663 = vmul.f32 %v1598, %v1662
    %v1664 = vsub.f32 1.0, %v1663
    %v1665 = vmul.f32 %v1662, %v1664
    %v1666 = vadd.f32 %v1662, %v1665
    %vm1667 = vweird.f32 %v1598
    %vm1668 = vweird.f32 %v1662
    %vm1669 = vmor %vm1667, %vm1668
    %v1670 = vsel %vm1669, %v1662, %v1666
    %v1671 = vand.u32 2147483647, %v1598
    %vm1672 = vcmp.eq.f32.partialorder %v1671, 8.507059e+37
    %v1673 = vand.u32 %v1598, 2147483648
    %v1674 = vor.u32 1.1754944e-38, %v1673
    %v1675 = vsel %vm1672, %v1674, %v1670
    %v1676 = vmul.f32 1.0, %v1675
    %v1677 = vrcp.pop %v1599
    %v1678 = vmul.f32 %v1599, %v1677
    %v1679 = vsub.f32 1.0, %v1678
    %v1680 = vmul.f32 %v1677, %v1679
    %v1681 = vadd.f32 %v1677, %v1680
    %vm1682 = vweird.f32 %v1599
    %vm1683 = vweird.f32 %v1677
    %vm1684 = vmor %vm1682, %vm1683
    %v1685 = vsel %vm1684, %v1677, %v1681
    %v1686 = vand.u32 2147483647, %v1599
    %vm1687 = vcmp.eq.f32.partialorder %v1686, 8.507059e+37
    %v1688 = vand.u32 %v1599, 2147483648
    %v1689 = vor.u32 1.1754944e-38, %v1688
    %v1690 = vsel %vm1687, %v1689, %v1685
    %v1691 = vmul.f32 1.0, %v1690
    %v1692 = vrcp.pop %v1600
    %v1693 = vmul.f32 %v1600, %v1692
    %v1694 = vsub.f32 1.0, %v1693
    %v1695 = vmul.f32 %v1692, %v1694
    %v1696 = vadd.f32 %v1692, %v1695
    %vm1697 = vweird.f32 %v1600
    %vm1698 = vweird.f32 %v1692
    %vm1699 = vmor %vm1697, %vm1698
    %v1700 = vsel %vm1699, %v1692, %v1696
    %v1701 = vand.u32 2147483647, %v1600
    %vm1702 = vcmp.eq.f32.partialorder %v1701, 8.507059e+37
    %v1703 = vand.u32 %v1600, 2147483648
    %v1704 = vor.u32 1.1754944e-38, %v1703
    %v1705 = vsel %vm1702, %v1704, %v1700
    %v1706 = vmul.f32 1.0, %v1705
    %v1707 = vrcp.pop %v1601
    %v1708 = vmul.f32 %v1601, %v1707
    %v1709 = vsub.f32 1.0, %v1708
    %v1710 = vmul.f32 %v1707, %v1709
    %v1711 = vadd.f32 %v1707, %v1710
    %vm1712 = vweird.f32 %v1601
    %vm1713 = vweird.f32 %v1707
    %vm1714 = vmor %vm1712, %vm1713
    %v1715 = vsel %vm1714, %v1707, %v1711
    %v1716 = vand.u32 2147483647, %v1601
    %vm1717 = vcmp.eq.f32.partialorder %v1716, 8.507059e+37
    %v1718 = vand.u32 %v1601, 2147483648
    %v1719 = vor.u32 1.1754944e-38, %v1718
    %v1720 = vsel %vm1717, %v1719, %v1715
    %v1721 = vmul.f32 1.0, %v1720
    %v1722 = vpack.c.bf16 %v1631, %v1616
    %v1723 = vpack.c.bf16 %v1661, %v1646
    %v1724 = vpack.c.bf16 %v1691, %v1676
    %v1725 = vpack.c.bf16 %v1721, %v1706
    %1726 = vst [vmem:[%s6] sm:$0xff] %v1722
    %1727 = vst [vmem:[%s6 + $0x8] sm:$0xff] %v1723
    %1728 = vst [vmem:[%s6 + $0x10] sm:$0xff] %v1724
    %1729 = vst [vmem:[%s6 + $0x18] sm:$0xff] %v1725
    %1730 = vst [vmem:[%s7] sm:$0xff] %v960
    %1731 = vst [vmem:[%s7 + $0x8] sm:$0xff] %v1064
    // Predicated region
    $region34: #{forward.1} parent=1 // pred_check
      _
    $region35: #{forward.1} parent=1 // pred_check_branch
      %1733 = sbr.rel (0) target = $region37
    $region36: #{forward.1} parent=1 // pred_region
      _
    $region37: #{forward.1} parent=1 // pred_fallthru
      _
    // Predicated region
    $region38: #{forward.1} parent=1 // pred_check
      _
    $region39: #{forward.1} parent=1 // pred_check_branch
      %1735 = sbr.rel (0) target = $region41
    $region40: #{forward.1} parent=1 // pred_region
      _
    $region41: #{forward.1} parent=1 // pred_fallthru
      _
    // Predicated region
    $region42: #{forward.1} parent=1 // pred_check
      _
    $region43: #{forward.1} parent=1 // pred_check_branch
      %1737 = sbr.rel (0) target = $region45
    $region44: #{forward.1} parent=1 // pred_region
      _
    $region45: #{forward.1} parent=1 // pred_fallthru
      _
    // Predicated region
    $region46: #{forward.1} parent=1 // pred_check
      _
    $region47: #{forward.1} parent=1 // pred_check_branch
      %1739 = sbr.rel (0) target = $region49
    $region48: #{forward.1} parent=1 // pred_region
      _
    $region49: #{forward.1} parent=1 // pred_fallthru
      _
    %1740 = vsyncpa [#allocation3], 1
    %1741 = vsyncpa [#allocation5], 1

</llo_original>
